<compile_context>
chip_gen: v5e
topology: v5e:2x2
jax: 0.10.0
libtpu: 0.0.40
codegen_flags: <defaults>
</compile_context>

<pallas_src>
import functools

import jax
import jax.numpy as jnp
import numpy as np
from jax.experimental import pallas as pl
from jax.experimental.pallas import tpu as pltpu

_BN_EPS = 1e-5  # nn.BatchNorm2d default


def _upconv_kernel(taps_ref, w_ref, comb_ref, gb_ref, o_ref,
                   sum_ref, ssq_ref, scale_ref, shift_ref,
                   *, inv_count, eps):
    """Grid = (pass, m_tile), iterated pass-major (all tiles of pass 0 first).

    pass 0: conv GEMM per tile, accumulate per-column sum / sum-of-squares.
    pass 1, tile 0: fold column stats into per-channel fused BN scale/shift.
    pass 1: recompute conv GEMM, apply y*scale + shift, ReLU, store.
    """
    pass_idx = pl.program_id(0)
    tile_idx = pl.program_id(1)

    # Single long-K GEMM: (TM, 9*Cin) x (9*Cin, C) -> (TM, C) on the MXU.
    y = jnp.dot(taps_ref[...], w_ref[...], preferred_element_type=jnp.float32)

    @pl.when(pass_idx == 0)
    def _stats():
        @pl.when(tile_idx == 0)
        def _init():
            sum_ref[...] = jnp.zeros_like(sum_ref)
            ssq_ref[...] = jnp.zeros_like(ssq_ref)

        sum_ref[...] += jnp.sum(y, axis=0, keepdims=True)
        ssq_ref[...] += jnp.sum(y * y, axis=0, keepdims=True)

    @pl.when((pass_idx == 1) & (tile_idx == 0))
    def _finalize():
        # comb sums the 4 phase-columns of each BN channel and broadcasts the
        # per-channel total back to every phase-column (tiny MXU matmul; this
        # avoids sub-128-lane reshape/concat gymnastics on the VPU/XLU).
        tot = jnp.dot(sum_ref[...], comb_ref[...],
                      preferred_element_type=jnp.float32)
        tot2 = jnp.dot(ssq_ref[...], comb_ref[...],
                       preferred_element_type=jnp.float32)
        mean = tot * inv_count
        var = jnp.maximum(tot2 * inv_count - mean * mean, 0.0)
        gamma = gb_ref[0:1, :]
        beta = gb_ref[1:2, :]
        scale = gamma * jax.lax.rsqrt(var + eps)
        scale_ref[...] = scale
        shift_ref[...] = beta - mean * scale

    @pl.when(pass_idx == 1)
    def _apply():
        o_ref[...] = jnp.maximum(
            y * scale_ref[...] + shift_ref[...], 0.0).astype(o_ref.dtype)


def upconv(x_nchw, w_oihw, b, gamma, beta, *, tile_m=512):
    """Pallas UpConv forward. x: (N, Cin, H, W) -> (N, Cout, 2H, 2W), f32."""
    del b  # Conv bias is exactly cancelled by training-mode BatchNorm.
    N, Cin, H, W = x_nchw.shape
    Cout = w_oihw.shape[0]
    M = N * H * W                      # one row per ORIGINAL pixel
    K9 = 9 * Cin                       # folded 3x3 taps on the original image
    c_real = 4 * Cout                  # 4 sub-pixel phases x Cout (exact width)
    tile_m = max(8, min(tile_m, ((M + 7) // 8) * 8))  # clamp for tiny inputs
    m_pad = ((M + tile_m - 1) // tile_m) * tile_m     # zero-row padding
    mt = m_pad // tile_m
    f32 = jnp.float32

    # ---- glue: NCHW -> NHWC, zero pad, fold the 9 shifted windows into K ----
    x = jnp.transpose(x_nchw.astype(f32), (0, 2, 3, 1))        # (N, H, W, Cin)
    xp = jnp.pad(x, ((0, 0), (1, 1), (1, 1), (0, 0)))          # padding = 1
    taps = jnp.concatenate(
        [xp[:, ky:ky + H, kx:kx + W, :] for ky in range(3) for kx in range(3)],
        axis=-1).reshape(M, K9)                                # (M, 9*Cin)
    taps = jnp.pad(taps, ((0, m_pad - M), (0, 0)))
    # TODO(synk): for very large images, extract the 9 windows in-kernel from
    # a halo'd row-tile (manual DMA) instead of materializing (M, 9*Cin) here.

    # ---- sub-pixel effective weights: phase (py,px) row/col tap mapping -----
    # For upsampled row 2i+py, kernel row kh reads original tap ky=(py+kh+1)//2.
    R = np.zeros((2, 3, 3), np.float32)
    for p in range(2):
        for h in range(3):
            R[p, h, (p + h + 1) // 2] = 1.0
    w_eff = jnp.einsum('pht,qwu,cihw->tuipqc', R, R, w_oihw.astype(f32),
                       precision=jax.lax.Precision.HIGHEST)
    w_big = w_eff.reshape(K9, c_real)                          # (9*Cin, 4*Cout)

    # Combine matrix: per-channel total over its 4 phase columns, broadcast
    # back to each phase column.
    comb = jnp.asarray(np.tile(np.eye(Cout, dtype=np.float32), (4, 4)))

    # Gamma/beta replicated per phase column.
    gcol = jnp.tile(gamma.astype(f32), 4)
    bcol = jnp.tile(beta.astype(f32), 4)
    gb = jnp.stack([gcol, bcol], axis=0)                       # (2, 4*Cout)

    kernel = functools.partial(_upconv_kernel,
                               inv_count=1.0 / (4.0 * M), eps=_BN_EPS)

    out_full = pl.pallas_call(
        kernel,
        out_shape=jax.ShapeDtypeStruct((m_pad, c_real), f32),
        grid=(2, mt),
        in_specs=[
            pl.BlockSpec((tile_m, K9), lambda p, t: (t, 0)),      # taps (tiled)
            pl.BlockSpec((K9, c_real), lambda p, t: (0, 0)),      # weights
            pl.BlockSpec((c_real, c_real), lambda p, t: (0, 0)),  # combine
            pl.BlockSpec((2, c_real), lambda p, t: (0, 0)),       # gamma/beta
        ],
        # During pass 0 all iterations map to output block 0 (never written),
        # so nothing is flushed until pass 1 writes real data: 1x output traffic.
        out_specs=pl.BlockSpec((tile_m, c_real), lambda p, t: (t * p, 0)),
        scratch_shapes=[
            pltpu.VMEM((1, c_real), f32),   # per-column sum
            pltpu.VMEM((1, c_real), f32),   # per-column sum of squares
            pltpu.VMEM((1, c_real), f32),   # fused BN scale
            pltpu.VMEM((1, c_real), f32),   # fused BN shift
        ],
        compiler_params=pltpu.CompilerParams(
            # Both axes sequential: the M axis feeds a shared stats scratch
            # and pass 1 depends on all of pass 0.
            dimension_semantics=("arbitrary", "arbitrary")),
    )(taps, w_big, comb, gb)

    # (M, 4*Cout) -> (N, Cout, 2H, 2W): phase-major columns = (py, px, Cout).
    out = out_full[:M, :].reshape(N, H, W, 2, 2, Cout)
    out = jnp.transpose(out, (0, 5, 1, 3, 2, 4))
    return out.reshape(N, Cout, 2 * H, 2 * W)


def upconv_ref(x_nchw, w_oihw, b, gamma, beta, eps=_BN_EPS):
    """Pure-JAX reference matching PyTorch semantics (training-mode BN)."""
    x = jnp.repeat(jnp.repeat(x_nchw, 2, axis=2), 2, axis=3)
    y = jax.lax.conv_general_dilated(
        x, w_oihw, window_strides=(1, 1), padding=((1, 1), (1, 1)),
        dimension_numbers=("NCHW", "OIHW", "NCHW"),
        precision=jax.lax.Precision.HIGHEST)
    y = y + b.reshape(1, -1, 1, 1)
    mean = y.mean(axis=(0, 2, 3), keepdims=True)
    var = ((y - mean) ** 2).mean(axis=(0, 2, 3), keepdims=True)
    y = (y - mean) * jax.lax.rsqrt(var + eps) * gamma.reshape(1, -1, 1, 1) \
        + beta.reshape(1, -1, 1, 1)
    return jnp.maximum(y, 0.0)


if __name__ == "__main__":
    key = jax.random.PRNGKey(0)
    kx, kw, kb, kg, kbe = jax.random.split(key, 5)

    N, Cin, Cout, H, W = 2, 4, 8, 16, 16
    x = jax.random.normal(kx, (N, Cin, H, W), jnp.float32)

    # Parameter shapes per nn.Conv2d(Cin, Cout, 3) and nn.BatchNorm2d(Cout);
    # PyTorch-style uniform bounds for the conv, non-trivial BN affine so the
    # fused scale/shift path is actually exercised.
    fan_in = Cin * 3 * 3
    bound = 1.0 / np.sqrt(fan_in)
    w = jax.random.uniform(kw, (Cout, Cin, 3, 3), jnp.float32, -bound, bound)
    b = jax.random.uniform(kb, (Cout,), jnp.float32, -bound, bound)
    gamma = jax.random.uniform(kg, (Cout,), jnp.float32, 0.5, 1.5)
    beta = jax.random.uniform(kbe, (Cout,), jnp.float32, -0.5, 0.5)

    out = jax.block_until_ready(upconv(x, w, b, gamma, beta))
    ref = jax.block_until_ready(upconv_ref(x, w, b, gamma, beta))

    assert out.shape == (N, Cout, 2 * H, 2 * W), out.shape
    np.testing.assert_allclose(np.asarray(out), np.asarray(ref),
                               atol=2e-4, rtol=2e-4)
    print("KERNEL_OK")
</pallas_src>

<mosaic_0001>
module attributes {stable_mosaic.version = 11 : i64} {
  func.func @_upconv_kernel(%arg0: i32, %arg1: i32, %arg2: memref<512x36xf32, #tpu.memory_space<vmem>>, %arg3: memref<36x32xf32, #tpu.memory_space<vmem>>, %arg4: memref<32x32xf32, #tpu.memory_space<vmem>>, %arg5: memref<2x32xf32, #tpu.memory_space<vmem>>, %arg6: memref<512x32xf32, #tpu.memory_space<vmem>>, %arg7: memref<1x32xf32, #tpu.memory_space<vmem>>, %arg8: memref<1x32xf32, #tpu.memory_space<vmem>>, %arg9: memref<1x32xf32, #tpu.memory_space<vmem>>, %arg10: memref<1x32xf32, #tpu.memory_space<vmem>>) attributes {dimension_semantics = [#tpu.dimension_semantics<arbitrary>, #tpu.dimension_semantics<arbitrary>], iteration_bounds = array<i64: 2, 1>, scalar_prefetch = 0 : i64, scratch_operands = 4 : i64, tpu.core_type = #tpu.core_type<tc>, window_params = [{transform_indices = @transform_0, window_bounds = array<i64: 512, 36>}, {pipeline_mode = #tpu.pipeline_mode<synchronous>, transform_indices = @transform_1, window_bounds = array<i64: 36, 32>}, {pipeline_mode = #tpu.pipeline_mode<synchronous>, transform_indices = @transform_2, window_bounds = array<i64: 32, 32>}, {pipeline_mode = #tpu.pipeline_mode<synchronous>, transform_indices = @transform_3, window_bounds = array<i64: 2, 32>}, {transform_indices = @transform_4, window_bounds = array<i64: 512, 32>}]} {
    %c0 = arith.constant 0 : index
    %c0_0 = arith.constant 0 : index
    %0 = vector.load %arg2[%c0, %c0_0] : memref<512x36xf32, #tpu.memory_space<vmem>>, vector<512x36xf32>
    %c0_1 = arith.constant 0 : index
    %c0_2 = arith.constant 0 : index
    %1 = vector.load %arg3[%c0_1, %c0_2] : memref<36x32xf32, #tpu.memory_space<vmem>>, vector<36x32xf32>
    %cst = arith.constant dense<0.000000e+00> : vector<512x32xf32>
    %2 = tpu.matmul %0, %1, %cst {dimension_numbers = #tpu.dot_dimension_numbers<[1], [0], [0], [1], [0, 0, 1, 1], [], []>} : vector<512x36xf32>, vector<36x32xf32>, vector<512x32xf32> -> vector<512x32xf32>
    %c0_i32 = arith.constant 0 : i32
    %3 = arith.cmpi eq, %arg0, %c0_i32 : i32
    %4 = arith.extui %3 : i1 to i32
    %c0_i32_3 = arith.constant 0 : i32
    %5 = arith.cmpi ne, %4, %c0_i32_3 : i32
    scf.if %5 {
      %c0_i32_8 = arith.constant 0 : i32
      %14 = arith.cmpi eq, %arg1, %c0_i32_8 : i32
      %15 = arith.extui %14 : i1 to i32
      %c0_i32_9 = arith.constant 0 : i32
      %16 = arith.cmpi ne, %15, %c0_i32_9 : i32
      scf.if %16 {
        %cst_20 = arith.constant 0.000000e+00 : f32
        %28 = vector.broadcast %cst_20 : f32 to vector<1x32xf32>
        %c0_21 = arith.constant 0 : index
        %c0_22 = arith.constant 0 : index
        %29 = vector.load %arg7[%c0_21, %c0_22] : memref<1x32xf32, #tpu.memory_space<vmem>>, vector<1x32xf32>
        tpu.vector_store %arg7[%c0_21, %c0_22], %28 {strides = array<i32>} : memref<1x32xf32, #tpu.memory_space<vmem>>, vector<1x32xf32>,
        %cst_23 = arith.constant 0.000000e+00 : f32
        %30 = vector.broadcast %cst_23 : f32 to vector<1x32xf32>
        %c0_24 = arith.constant 0 : index
        %c0_25 = arith.constant 0 : index
        %31 = vector.load %arg8[%c0_24, %c0_25] : memref<1x32xf32, #tpu.memory_space<vmem>>, vector<1x32xf32>
        tpu.vector_store %arg8[%c0_24, %c0_25], %30 {strides = array<i32>} : memref<1x32xf32, #tpu.memory_space<vmem>>, vector<1x32xf32>,
      } else {
      }
      %c0_10 = arith.constant 0 : index
      %c0_11 = arith.constant 0 : index
      %17 = vector.load %arg7[%c0_10, %c0_11] : memref<1x32xf32, #tpu.memory_space<vmem>>, vector<1x32xf32>
      %cst_12 = arith.constant dense<0.000000e+00> : vector<32xf32>
      %18 = vector.multi_reduction <add>, %2, %cst_12 [0] : vector<512x32xf32> to vector<32xf32>
      %19 = vector.shape_cast %18 : vector<32xf32> to vector<1x32xf32>
      %20 = arith.addf %17, %19 : vector<1x32xf32>
      %c0_13 = arith.constant 0 : index
      %c0_14 = arith.constant 0 : index
      %21 = vector.load %arg7[%c0_13, %c0_14] : memref<1x32xf32, #tpu.memory_space<vmem>>, vector<1x32xf32>
      tpu.vector_store %arg7[%c0_13, %c0_14], %20 {strides = array<i32>} : memref<1x32xf32, #tpu.memory_space<vmem>>, vector<1x32xf32>,
      %c0_15 = arith.constant 0 : index
      %c0_16 = arith.constant 0 : index
      %22 = vector.load %arg8[%c0_15, %c0_16] : memref<1x32xf32, #tpu.memory_space<vmem>>, vector<1x32xf32>
      %23 = arith.mulf %2, %2 : vector<512x32xf32>
      %cst_17 = arith.constant dense<0.000000e+00> : vector<32xf32>
      %24 = vector.multi_reduction <add>, %23, %cst_17 [0] : vector<512x32xf32> to vector<32xf32>
      %25 = vector.shape_cast %24 : vector<32xf32> to vector<1x32xf32>
      %26 = arith.addf %22, %25 : vector<1x32xf32>
      %c0_18 = arith.constant 0 : index
      %c0_19 = arith.constant 0 : index
      %27 = vector.load %arg8[%c0_18, %c0_19] : memref<1x32xf32, #tpu.memory_space<vmem>>, vector<1x32xf32>
      tpu.vector_store %arg8[%c0_18, %c0_19], %26 {strides = array<i32>} : memref<1x32xf32, #tpu.memory_space<vmem>>, vector<1x32xf32>,
    } else {
    }
    %c1_i32 = arith.constant 1 : i32
    %6 = arith.cmpi eq, %arg0, %c1_i32 : i32
    %c0_i32_4 = arith.constant 0 : i32
    %7 = arith.cmpi eq, %arg1, %c0_i32_4 : i32
    %8 = arith.andi %6, %7 : i1
    %9 = arith.extui %8 : i1 to i32
    %c0_i32_5 = arith.constant 0 : i32
    %10 = arith.cmpi ne, %9, %c0_i32_5 : i32
    scf.if %10 {
      %c0_8 = arith.constant 0 : index
      %c0_9 = arith.constant 0 : index
      %14 = vector.load %arg7[%c0_8, %c0_9] : memref<1x32xf32, #tpu.memory_space<vmem>>, vector<1x32xf32>
      %c0_10 = arith.constant 0 : index
      %c0_11 = arith.constant 0 : index
      %15 = vector.load %arg4[%c0_10, %c0_11] : memref<32x32xf32, #tpu.memory_space<vmem>>, vector<32x32xf32>
      %cst_12 = arith.constant dense<0.000000e+00> : vector<1x32xf32>
      %16 = tpu.matmul %14, %15, %cst_12 {dimension_numbers = #tpu.dot_dimension_numbers<[1], [0], [0], [1], [0, 0, 1, 1], [], []>} : vector<1x32xf32>, vector<32x32xf32>, vector<1x32xf32> -> vector<1x32xf32>
      %c0_13 = arith.constant 0 : index
      %c0_14 = arith.constant 0 : index
      %17 = vector.load %arg8[%c0_13, %c0_14] : memref<1x32xf32, #tpu.memory_space<vmem>>, vector<1x32xf32>
      %c0_15 = arith.constant 0 : index
      %c0_16 = arith.constant 0 : index
      %18 = vector.load %arg4[%c0_15, %c0_16] : memref<32x32xf32, #tpu.memory_space<vmem>>, vector<32x32xf32>
      %cst_17 = arith.constant dense<0.000000e+00> : vector<1x32xf32>
      %19 = tpu.matmul %17, %18, %cst_17 {dimension_numbers = #tpu.dot_dimension_numbers<[1], [0], [0], [1], [0, 0, 1, 1], [], []>} : vector<1x32xf32>, vector<32x32xf32>, vector<1x32xf32> -> vector<1x32xf32>
      %cst_18 = arith.constant 4.8828125E-4 : f32
      %20 = vector.broadcast %cst_18 : f32 to vector<1x32xf32>
      %21 = arith.mulf %16, %20 : vector<1x32xf32>
      %cst_19 = arith.constant 4.8828125E-4 : f32
      %22 = vector.broadcast %cst_19 : f32 to vector<1x32xf32>
      %23 = arith.mulf %19, %22 : vector<1x32xf32>
      %24 = arith.mulf %21, %21 : vector<1x32xf32>
      %25 = arith.subf %23, %24 : vector<1x32xf32>
      %cst_20 = arith.constant 0.000000e+00 : f32
      %26 = vector.broadcast %cst_20 : f32 to vector<1x32xf32>
      %27 = arith.maximumf %25, %26 : vector<1x32xf32>
      %c0_21 = arith.constant 0 : index
      %c0_22 = arith.constant 0 : index
      %28 = vector.load %arg5[%c0_21, %c0_22] : memref<2x32xf32, #tpu.memory_space<vmem>>, vector<1x32xf32>
      %c1 = arith.constant 1 : index
      %c0_23 = arith.constant 0 : index
      %29 = vector.load %arg5[%c1, %c0_23] : memref<2x32xf32, #tpu.memory_space<vmem>>, vector<1x32xf32>
      %cst_24 = arith.constant 9.99999974E-6 : f32
      %30 = vector.broadcast %cst_24 : f32 to vector<1x32xf32>
      %31 = arith.addf %27, %30 : vector<1x32xf32>
      %32 = math.rsqrt %31 : vector<1x32xf32>
      %33 = arith.mulf %28, %32 : vector<1x32xf32>
      %c0_25 = arith.constant 0 : index
      %c0_26 = arith.constant 0 : index
      %34 = vector.load %arg9[%c0_25, %c0_26] : memref<1x32xf32, #tpu.memory_space<vmem>>, vector<1x32xf32>
      tpu.vector_store %arg9[%c0_25, %c0_26], %33 {strides = array<i32>} : memref<1x32xf32, #tpu.memory_space<vmem>>, vector<1x32xf32>,
      %35 = arith.mulf %21, %33 : vector<1x32xf32>
      %36 = arith.subf %29, %35 : vector<1x32xf32>
      %c0_27 = arith.constant 0 : index
      %c0_28 = arith.constant 0 : index
      %37 = vector.load %arg10[%c0_27, %c0_28] : memref<1x32xf32, #tpu.memory_space<vmem>>, vector<1x32xf32>
      tpu.vector_store %arg10[%c0_27, %c0_28], %36 {strides = array<i32>} : memref<1x32xf32, #tpu.memory_space<vmem>>, vector<1x32xf32>,
    } else {
    }
    %c1_i32_6 = arith.constant 1 : i32
    %11 = arith.cmpi eq, %arg0, %c1_i32_6 : i32
    %12 = arith.extui %11 : i1 to i32
    %c0_i32_7 = arith.constant 0 : i32
    %13 = arith.cmpi ne, %12, %c0_i32_7 : i32
    scf.if %13 {
      %c0_8 = arith.constant 0 : index
      %c0_9 = arith.constant 0 : index
      %14 = vector.load %arg9[%c0_8, %c0_9] : memref<1x32xf32, #tpu.memory_space<vmem>>, vector<1x32xf32>
      %15 = vector.broadcast %14 : vector<1x32xf32> to vector<512x32xf32>
      %16 = arith.mulf %2, %15 : vector<512x32xf32>
      %c0_10 = arith.constant 0 : index
      %c0_11 = arith.constant 0 : index
      %17 = vector.load %arg10[%c0_10, %c0_11] : memref<1x32xf32, #tpu.memory_space<vmem>>, vector<1x32xf32>
      %18 = vector.broadcast %17 : vector<1x32xf32> to vector<512x32xf32>
      %19 = arith.addf %16, %18 : vector<512x32xf32>
      %cst_12 = arith.constant 0.000000e+00 : f32
      %20 = vector.broadcast %cst_12 : f32 to vector<512x32xf32>
      %21 = arith.maximumf %19, %20 : vector<512x32xf32>
      %c0_13 = arith.constant 0 : index
      %c0_14 = arith.constant 0 : index
      %22 = vector.load %arg6[%c0_13, %c0_14] : memref<512x32xf32, #tpu.memory_space<vmem>>, vector<512x32xf32>
      tpu.vector_store %arg6[%c0_13, %c0_14], %21 {strides = array<i32>} : memref<512x32xf32, #tpu.memory_space<vmem>>, vector<512x32xf32>,
    } else {
    }
    return
  }
  func.func @transform_0(%arg0: i32, %arg1: i32) -> (i32, i32) {
    %c0_i32 = arith.constant 0 : i32
    %c0_i32_0 = arith.constant 0 : i32
    return %arg1, %c0_i32 : i32, i32
  }
  func.func @transform_1(%arg0: i32, %arg1: i32) -> (i32, i32) {
    %c0_i32 = arith.constant 0 : i32
    %c0_i32_0 = arith.constant 0 : i32
    %c0_i32_1 = arith.constant 0 : i32
    return %c0_i32, %c0_i32_0 : i32, i32
  }
  func.func @transform_2(%arg0: i32, %arg1: i32) -> (i32, i32) {
    %c0_i32 = arith.constant 0 : i32
    %c0_i32_0 = arith.constant 0 : i32
    %c0_i32_1 = arith.constant 0 : i32
    return %c0_i32, %c0_i32_0 : i32, i32
  }
  func.func @transform_3(%arg0: i32, %arg1: i32) -> (i32, i32) {
    %c0_i32 = arith.constant 0 : i32
    %c0_i32_0 = arith.constant 0 : i32
    %c0_i32_1 = arith.constant 0 : i32
    return %c0_i32, %c0_i32_0 : i32, i32
  }
  func.func @transform_4(%arg0: i32, %arg1: i32) -> (i32, i32) {
    %0 = arith.muli %arg1, %arg0 : i32
    %c0_i32 = arith.constant 0 : i32
    %c0_i32_0 = arith.constant 0 : i32
    return %0, %c0_i32 : i32, i32
  }
}

</mosaic_0001>

<llo_original>
// kernel: tpu_custom_call.1
$region0: #{tpu_custom_call.1}
  #allocation0 [shape = 'u32[]', space=smem, size = 0x4, offset = 0x4, fixed_abs, tag = 'smem constant byte address 0x4 - core index']
  #allocation1 [shape = 'u32[72,128]{1,0:T(1,128)}', space=vmem, size = 0x9000, scoped, tag = 'internal scratch']
  #allocation2 [shape = 'f32[1,32]{1,0:T(1,128)}', space=vmem, size = 0x200, scoped, tag = 'scratch operand']
  #allocation3 [shape = 'f32[1,32]{1,0:T(1,128)}', space=vmem, size = 0x200, scoped, tag = 'scratch operand']
  #allocation4 [shape = 'f32[1,32]{1,0:T(1,128)}', space=vmem, size = 0x200, scoped, tag = 'scratch operand']
  #allocation5 [shape = 'f32[1,32]{1,0:T(1,128)}', space=vmem, size = 0x200, scoped, tag = 'scratch operand']
  %s0 = inlined_call_operand.vmem [shape: f32[512,36], index: 0, kind: input, shape index: {}]
  %s1 = inlined_call_operand.vmem [shape: f32[36,32], index: 1, kind: input, shape index: {}]
  %s2 = inlined_call_operand.vmem [shape: f32[32,32], index: 2, kind: input, shape index: {}]
  %s3 = inlined_call_operand.vmem [shape: f32[2,32], index: 3, kind: input, shape index: {}]
  %s4 = inlined_call_operand.vmem [shape: f32[512,32], index: 4, kind: output, shape index: {}]
  %s5 = sld [smem:[#allocation0]]
  $region65: #{tpu_custom_call.1} parent=0
    _
  %s7 = ssub.s32 1, %s5
  %s8 = scalar_select 0, %s7, %s5
  loop: start=0, step=1, limit=4
  $region2: #{tpu_custom_call.1} parent=0 // loop_pre_header
    _
  $region3: #{tpu_custom_call.1} parent=0 // loop_header
    %s10 = sphi 0, %s14
    %p11 = scmp.ge.s32.totalorder %s10, 4
    %s17 = sphi 0, %s29
    %s18 = sphi 0, %s25
    %s19 = sphi 0, %s17
    %s20 = sphi 0, %s18
    %s21 = sphi 0, %s19
    %s22 = sphi 0, %s20
    %s32 = sphi 0, %s34
    %s35 = sphi 0, %s32
    %s36 = sphi 0, %s35
    %s52 = sphi 0, %s36
    %s56 = sphi 0, %s56
    %s58 = sphi 0, %s56
    %s59 = sphi 0, %s58
    %s73 = sphi 0, %s59
    %s77 = sphi 0, %s77
    %s79 = sphi 0, %s77
    %s80 = sphi 0, %s79
    %s94 = sphi 0, %s80
    %s98 = sphi 0, %s98
    %s100 = sphi 0, %s98
    %s101 = sphi 0, %s100
    %s115 = sphi 0, %s101
    %s123 = sphi 0, %s125
    %s126 = sphi 0, %s123
    %s127 = sphi 0, %s126
    %s143 = sphi 0, %s127
  $region4: #{tpu_custom_call.1} parent=0 // loop_header_branch
    %13 = sbr.rel (%p11) target = $region8
  $region5: #{tpu_custom_call.1} parent=0 // loop_body
    %s15 = ssub.s32 %s10, 1
    %s16 = ssub.s32 %s10, 2
    %s23 = sadd.s32 1, %s18
    %p24 = scmp.ge.s32.totalorder %s23, 1
    %s25 = scalar_select %p24, 0, %s23
    %s26 = sadd.s32 1, %s17
    %s27 = scalar_select %p24, %s26, %s17
    %p28 = scmp.ge.s32.totalorder %s27, 2
    %s29 = scalar_select %p28, 0, %s27
    %s30 = ssub.s32 %s18, %s25
    %p31 = scmp.eq.s32.totalorder %s30, 0
    %s33 = sadd.s32 %s32, 1
    %s34 = scalar_select %p31, %s32, %s33
    %p37 = pneg %p31
    %p38 = scmp.eq.s32.totalorder %s10, 1
    %p39 = por %p37, %p38
    %p40 = scmp.ne.s32.totalorder %s32, %s35
    %p41 = scmp.eq.s32.totalorder %s10, 0
    %p42 = por %p40, %p41
    %p43 = scmp.ne.s32.totalorder %s32, %s35
    %p44 = scmp.eq.s32.totalorder %s15, 1
    %p45 = por %p43, %p44
    %p46 = scmp.ne.s32.totalorder %s35, %s36
    %p47 = scmp.eq.s32.totalorder %s15, 0
    %p48 = por %p46, %p47
    %p49 = scmp.ne.s32.totalorder %s35, %s36
    %p50 = scmp.eq.s32.totalorder %s16, 1
    %p51 = por %p49, %p50
    %p53 = scmp.ne.s32.totalorder %s36, %s52
    %p54 = scmp.eq.s32.totalorder %s16, 0
    %p55 = por %p53, %p54
    %s57 = sadd.s32 %s56, 1
    %p60 = scmp.eq.s32.totalorder %s10, 1
    %p61 = scmp.ne.s32.totalorder %s56, %s58
    %p62 = scmp.eq.s32.totalorder %s10, 0
    %p63 = por %p61, %p62
    %p64 = scmp.ne.s32.totalorder %s56, %s58
    %p65 = scmp.eq.s32.totalorder %s15, 1
    %p66 = por %p64, %p65
    %p67 = scmp.ne.s32.totalorder %s58, %s59
    %p68 = scmp.eq.s32.totalorder %s15, 0
    %p69 = por %p67, %p68
    %p70 = scmp.ne.s32.totalorder %s58, %s59
    %p71 = scmp.eq.s32.totalorder %s16, 1
    %p72 = por %p70, %p71
    %p74 = scmp.ne.s32.totalorder %s59, %s73
    %p75 = scmp.eq.s32.totalorder %s16, 0
    %p76 = por %p74, %p75
    %s78 = sadd.s32 %s77, 1
    %p81 = scmp.eq.s32.totalorder %s10, 1
    %p82 = scmp.ne.s32.totalorder %s77, %s79
    %p83 = scmp.eq.s32.totalorder %s10, 0
    %p84 = por %p82, %p83
    %p85 = scmp.ne.s32.totalorder %s77, %s79
    %p86 = scmp.eq.s32.totalorder %s15, 1
    %p87 = por %p85, %p86
    %p88 = scmp.ne.s32.totalorder %s79, %s80
    %p89 = scmp.eq.s32.totalorder %s15, 0
    %p90 = por %p88, %p89
    %p91 = scmp.ne.s32.totalorder %s79, %s80
    %p92 = scmp.eq.s32.totalorder %s16, 1
    %p93 = por %p91, %p92
    %p95 = scmp.ne.s32.totalorder %s80, %s94
    %p96 = scmp.eq.s32.totalorder %s16, 0
    %p97 = por %p95, %p96
    %s99 = sadd.s32 %s98, 1
    %p102 = scmp.eq.s32.totalorder %s10, 1
    %p103 = scmp.ne.s32.totalorder %s98, %s100
    %p104 = scmp.eq.s32.totalorder %s10, 0
    %p105 = por %p103, %p104
    %p106 = scmp.ne.s32.totalorder %s98, %s100
    %p107 = scmp.eq.s32.totalorder %s15, 1
    %p108 = por %p106, %p107
    %p109 = scmp.ne.s32.totalorder %s100, %s101
    %p110 = scmp.eq.s32.totalorder %s15, 0
    %p111 = por %p109, %p110
    %p112 = scmp.ne.s32.totalorder %s100, %s101
    %p113 = scmp.eq.s32.totalorder %s16, 1
    %p114 = por %p112, %p113
    %p116 = scmp.ne.s32.totalorder %s101, %s115
    %p117 = scmp.eq.s32.totalorder %s16, 0
    %p118 = por %p116, %p117
    %s119 = smul.u32 %s18, %s17
    %s120 = smul.u32 %s25, %s29
    %s121 = ssub.s32 %s119, %s120
    %p122 = scmp.eq.s32.totalorder %s121, 0
    %s124 = sadd.s32 %s123, 1
    %s125 = scalar_select %p122, %s123, %s124
    %p128 = pneg %p122
    %p129 = scmp.eq.s32.totalorder %s10, 1
    %p130 = por %p128, %p129
    %p131 = scmp.ne.s32.totalorder %s123, %s126
    %p132 = scmp.eq.s32.totalorder %s10, 0
    %p133 = por %p131, %p132
    %p134 = scmp.ne.s32.totalorder %s123, %s126
    %p135 = scmp.eq.s32.totalorder %s15, 1
    %p136 = por %p134, %p135
    %p137 = scmp.ne.s32.totalorder %s126, %s127
    %p138 = scmp.eq.s32.totalorder %s15, 0
    %p139 = por %p137, %p138
    %p140 = scmp.ne.s32.totalorder %s126, %s127
    %p141 = scmp.eq.s32.totalorder %s16, 1
    %p142 = por %p140, %p141
    %p144 = scmp.ne.s32.totalorder %s127, %s143
    %p145 = scmp.eq.s32.totalorder %s16, 0
    %p146 = por %p144, %p145
    %p147 = scmp.le.s32.totalorder 1, %s10
    %p148 = scmp.lt.s32.totalorder %s10, 3
    %p149 = pnand %p147, %p148
    %p150 = pneg %p149
    // Predicated region
    $region9: #{tpu_custom_call.1} parent=5 // pred_check
      _
    $region10: #{tpu_custom_call.1} parent=5 // pred_check_branch
      %152 = sbr.rel (%p149) target = $region12
    $region11: #{tpu_custom_call.1} parent=5 // pred_region
      %s153 = ssub.s32 %s10, 1
      // Predicated region
      $region13: #{tpu_custom_call.1} parent=11 // pred_check
        %p154 = pneg %p48
      $region14: #{tpu_custom_call.1} parent=11 // pred_check_branch
        %156 = sbr.rel (%p154) target = $region16
      $region15: #{tpu_custom_call.1} parent=11 // pred_region
        %s157 = smul.u32 64, %s20
        %p158 = scmp.lt.s32.totalorder %s157, 63
        %s159 = scalar_select %p158, %s157, 63
        %s160 = smul.addr %s159, 8
        %s161 = scalar_lea.vmem %s0, %s160
        %s162 = smul.u32 64, %s20
      $region16: #{tpu_custom_call.1} parent=11 // pred_fallthru
        _
      // Predicated region
      $region17: #{tpu_custom_call.1} parent=11 // pred_check
        %p163 = pneg %p69
      $region18: #{tpu_custom_call.1} parent=11 // pred_check_branch
        %165 = sbr.rel (%p163) target = $region20
      $region19: #{tpu_custom_call.1} parent=11 // pred_region
        _
      $region20: #{tpu_custom_call.1} parent=11 // pred_fallthru
        _
      // Predicated region
      $region21: #{tpu_custom_call.1} parent=11 // pred_check
        %p166 = pneg %p90
      $region22: #{tpu_custom_call.1} parent=11 // pred_check_branch
        %168 = sbr.rel (%p166) target = $region24
      $region23: #{tpu_custom_call.1} parent=11 // pred_region
        _
      $region24: #{tpu_custom_call.1} parent=11 // pred_fallthru
        _
      // Predicated region
      $region25: #{tpu_custom_call.1} parent=11 // pred_check
        %p169 = pneg %p111
      $region26: #{tpu_custom_call.1} parent=11 // pred_check_branch
        %171 = sbr.rel (%p169) target = $region28
      $region27: #{tpu_custom_call.1} parent=11 // pred_region
        _
      $region28: #{tpu_custom_call.1} parent=11 // pred_fallthru
        _
    $region12: #{tpu_custom_call.1} parent=5 // pred_fallthru
      _
    %p172 = scmp.lt.s32.totalorder %s10, 2
    // Predicated region
    $region29: #{tpu_custom_call.1} parent=5 // pred_check
      %p173 = pneg %p172
    $region30: #{tpu_custom_call.1} parent=5 // pred_check_branch
      %175 = sbr.rel (%p173) target = $region32
    $region31: #{tpu_custom_call.1} parent=5 // pred_region
      _
    $region32: #{tpu_custom_call.1} parent=5 // pred_fallthru
      _
    %p176 = scmp.le.s32.totalorder 1, %s10
    %p177 = scmp.lt.s32.totalorder %s10, 3
    %p178 = pnand %p176, %p177
    %p179 = pneg %p178
    // Predicated region
    $region33: #{tpu_custom_call.1} parent=5 // pred_check
      _
    $region34: #{tpu_custom_call.1} parent=5 // pred_check_branch
      %181 = sbr.rel (%p178) target = $region36
    $region35: #{tpu_custom_call.1} parent=5 // pred_region
      %s182 = ssub.s32 %s10, 1
      %s183 = smul.u32 64, %s20
      %p184 = scmp.lt.s32.totalorder %s183, 63
      %s185 = scalar_select %p184, %s183, 63
      %s186 = smul.addr %s185, 8
      %s187 = scalar_lea.vmem %s0, %s186
      %p188 = pneg %p48
      %p189 = pneg %p45
      %p190 = pneg %p69
      %p191 = pneg %p66
      %p192 = pneg %p90
      %p193 = pneg %p87
      %p194 = pneg %p111
      %p195 = pneg %p108
      %p196 = pneg %p139
      %p197 = pneg %p136
      %s198 = smul.u32 %s20, %s19
      %s199 = smul.u32 64, %s198
      %p200 = scmp.lt.s32.totalorder %s199, 63
      %s201 = scalar_select %p200, %s199, 63
      %s202 = smul.addr %s201, 8
      %s203 = scalar_lea.vmem %s4, %s202
      %s204 = smul.u32 64, %s20
      %p205 = scmp.lt.s32.totalorder %s204, 63
      %s206 = scalar_select %p205, %s204, 63
      %s207 = smul.addr %s206, 8
      %s208 = scalar_lea.vmem %s0, %s207
      %s209 = smul.u32 64, %s20
      %s210 = smul.u32 %s20, %s19
      %s211 = smul.u32 64, %s210
      %p212 = scmp.lt.s32.totalorder %s211, 63
      %s213 = scalar_select %p212, %s211, 63
      %s214 = smul.addr %s213, 8
      %s215 = scalar_lea.vmem %s4, %s214
      %s216 = smul.u32 %s20, %s19
      %s217 = smul.u32 64, %s216
      %v218 = vld [vmem:[%s208] sm:$0xff]
      %v219 = vld [vmem:[%s208 + $0x8] sm:$0xff]
      %v220 = vld [vmem:[%s208 + $0x10] sm:$0xff]
      %v221 = vld [vmem:[%s208 + $0x18] sm:$0xff]
      %v222 = vld [vmem:[%s208 + $0x20] sm:$0xff]
      %v223 = vld [vmem:[%s208 + $0x28] sm:$0xff]
      %v224 = vld [vmem:[%s208 + $0x30] sm:$0xff]
      %v225 = vld [vmem:[%s208 + $0x38] sm:$0xff]
      %v226 = vld [vmem:[%s208 + $0x40] sm:$0xff]
      %v227 = vld [vmem:[%s208 + $0x48] sm:$0xff]
      %v228 = vld [vmem:[%s208 + $0x50] sm:$0xff]
      %v229 = vld [vmem:[%s208 + $0x58] sm:$0xff]
      %v230 = vld [vmem:[%s208 + $0x60] sm:$0xff]
      %v231 = vld [vmem:[%s208 + $0x68] sm:$0xff]
      %v232 = vld [vmem:[%s208 + $0x70] sm:$0xff]
      %v233 = vld [vmem:[%s208 + $0x78] sm:$0xff]
      %v234 = vld [vmem:[%s208 + $0x80] sm:$0xff]
      %v235 = vld [vmem:[%s208 + $0x88] sm:$0xff]
      %v236 = vld [vmem:[%s208 + $0x90] sm:$0xff]
      %v237 = vld [vmem:[%s208 + $0x98] sm:$0xff]
      %v238 = vld [vmem:[%s208 + $0xa0] sm:$0xff]
      %v239 = vld [vmem:[%s208 + $0xa8] sm:$0xff]
      %v240 = vld [vmem:[%s208 + $0xb0] sm:$0xff]
      %v241 = vld [vmem:[%s208 + $0xb8] sm:$0xff]
      %v242 = vld [vmem:[%s208 + $0xc0] sm:$0xff]
      %v243 = vld [vmem:[%s208 + $0xc8] sm:$0xff]
      %v244 = vld [vmem:[%s208 + $0xd0] sm:$0xff]
      %v245 = vld [vmem:[%s208 + $0xd8] sm:$0xff]
      %v246 = vld [vmem:[%s208 + $0xe0] sm:$0xff]
      %v247 = vld [vmem:[%s208 + $0xe8] sm:$0xff]
      %v248 = vld [vmem:[%s208 + $0xf0] sm:$0xff]
      %v249 = vld [vmem:[%s208 + $0xf8] sm:$0xff]
      %v250 = vld [vmem:[%s208 + $0x100] sm:$0xff]
      %v251 = vld [vmem:[%s208 + $0x108] sm:$0xff]
      %v252 = vld [vmem:[%s208 + $0x110] sm:$0xff]
      %v253 = vld [vmem:[%s208 + $0x118] sm:$0xff]
      %v254 = vld [vmem:[%s208 + $0x120] sm:$0xff]
      %v255 = vld [vmem:[%s208 + $0x128] sm:$0xff]
      %v256 = vld [vmem:[%s208 + $0x130] sm:$0xff]
      %v257 = vld [vmem:[%s208 + $0x138] sm:$0xff]
      %v258 = vld [vmem:[%s208 + $0x140] sm:$0xff]
      %v259 = vld [vmem:[%s208 + $0x148] sm:$0xff]
      %v260 = vld [vmem:[%s208 + $0x150] sm:$0xff]
      %v261 = vld [vmem:[%s208 + $0x158] sm:$0xff]
      %v262 = vld [vmem:[%s208 + $0x160] sm:$0xff]
      %v263 = vld [vmem:[%s208 + $0x168] sm:$0xff]
      %v264 = vld [vmem:[%s208 + $0x170] sm:$0xff]
      %v265 = vld [vmem:[%s208 + $0x178] sm:$0xff]
      %v266 = vld [vmem:[%s208 + $0x180] sm:$0xff]
      %v267 = vld [vmem:[%s208 + $0x188] sm:$0xff]
      %v268 = vld [vmem:[%s208 + $0x190] sm:$0xff]
      %v269 = vld [vmem:[%s208 + $0x198] sm:$0xff]
      %v270 = vld [vmem:[%s208 + $0x1a0] sm:$0xff]
      %v271 = vld [vmem:[%s208 + $0x1a8] sm:$0xff]
      %v272 = vld [vmem:[%s208 + $0x1b0] sm:$0xff]
      %v273 = vld [vmem:[%s208 + $0x1b8] sm:$0xff]
      %v274 = vld [vmem:[%s208 + $0x1c0] sm:$0xff]
      %v275 = vld [vmem:[%s208 + $0x1c8] sm:$0xff]
      %v276 = vld [vmem:[%s208 + $0x1d0] sm:$0xff]
      %v277 = vld [vmem:[%s208 + $0x1d8] sm:$0xff]
      %v278 = vld [vmem:[%s208 + $0x1e0] sm:$0xff]
      %v279 = vld [vmem:[%s208 + $0x1e8] sm:$0xff]
      %v280 = vld [vmem:[%s208 + $0x1f0] sm:$0xff]
      %v281 = vld [vmem:[%s208 + $0x1f8] sm:$0xff]
      %v282 = vld [vmem:[%s1] sm:$0xff]
      %v283 = vld [vmem:[%s1 + $0x8] sm:$0xff]
      %v284 = vld [vmem:[%s1 + $0x10] sm:$0xff]
      %v285 = vld [vmem:[%s1 + $0x18] sm:$0xff]
      %v286 = vld [vmem:[%s1 + $0x20] sm:$0xf]
      %vm287 = vcmask 293888
      %v289 = vsel %vm287, %v218, 0
      %v292 = vsel %vm287, %v219, 0
      %v295 = vsel %vm287, %v220, 0
      %v298 = vsel %vm287, %v221, 0
      %v301 = vsel %vm287, %v222, 0
      %v304 = vsel %vm287, %v223, 0
      %v307 = vsel %vm287, %v224, 0
      %v310 = vsel %vm287, %v225, 0
      %v313 = vsel %vm287, %v226, 0
      %v316 = vsel %vm287, %v227, 0
      %v319 = vsel %vm287, %v228, 0
      %v322 = vsel %vm287, %v229, 0
      %v325 = vsel %vm287, %v230, 0
      %v328 = vsel %vm287, %v231, 0
      %v331 = vsel %vm287, %v232, 0
      %v334 = vsel %vm287, %v233, 0
      %v337 = vsel %vm287, %v234, 0
      %v340 = vsel %vm287, %v235, 0
      %v343 = vsel %vm287, %v236, 0
      %v346 = vsel %vm287, %v237, 0
      %v349 = vsel %vm287, %v238, 0
      %v352 = vsel %vm287, %v239, 0
      %v355 = vsel %vm287, %v240, 0
      %v358 = vsel %vm287, %v241, 0
      %v361 = vsel %vm287, %v242, 0
      %v364 = vsel %vm287, %v243, 0
      %v367 = vsel %vm287, %v244, 0
      %v370 = vsel %vm287, %v245, 0
      %v373 = vsel %vm287, %v246, 0
      %v376 = vsel %vm287, %v247, 0
      %v379 = vsel %vm287, %v248, 0
      %v382 = vsel %vm287, %v249, 0
      %v385 = vsel %vm287, %v250, 0
      %v388 = vsel %vm287, %v251, 0
      %v391 = vsel %vm287, %v252, 0
      %v394 = vsel %vm287, %v253, 0
      %v397 = vsel %vm287, %v254, 0
      %v400 = vsel %vm287, %v255, 0
      %v403 = vsel %vm287, %v256, 0
      %v406 = vsel %vm287, %v257, 0
      %v409 = vsel %vm287, %v258, 0
      %v412 = vsel %vm287, %v259, 0
      %v415 = vsel %vm287, %v260, 0
      %v418 = vsel %vm287, %v261, 0
      %v421 = vsel %vm287, %v262, 0
      %v424 = vsel %vm287, %v263, 0
      %v427 = vsel %vm287, %v264, 0
      %v430 = vsel %vm287, %v265, 0
      %v433 = vsel %vm287, %v266, 0
      %v436 = vsel %vm287, %v267, 0
      %v439 = vsel %vm287, %v268, 0
      %v442 = vsel %vm287, %v269, 0
      %v445 = vsel %vm287, %v270, 0
      %v448 = vsel %vm287, %v271, 0
      %v451 = vsel %vm287, %v272, 0
      %v454 = vsel %vm287, %v273, 0
      %v457 = vsel %vm287, %v274, 0
      %v460 = vsel %vm287, %v275, 0
      %v463 = vsel %vm287, %v276, 0
      %v466 = vsel %vm287, %v277, 0
      %v469 = vsel %vm287, %v278, 0
      %v472 = vsel %vm287, %v279, 0
      %v475 = vsel %vm287, %v280, 0
      %v478 = vsel %vm287, %v281, 0
      %vm480 = vcmask 1043456
      %v482 = vsel %vm480, %v286, 0
      %484 = vmatpush.msra.mxu0 0.0
      %485 = vmatpush.msra.mxu0 0.0
      %486 = vmatpush.msra.mxu0 0.0
      %487 = vmatpush.msra.mxu0 0.0
      %488 = vmatpush.msra.mxu0 0.0
      %489 = vmatpush.msra.mxu0 0.0
      %490 = vmatpush.msra.mxu0 0.0
      %491 = vmatpush.msra.mxu0 0.0
      %492 = vmatpush.msra.mxu0 0.0
      %493 = vmatpush.msra.mxu0 0.0
      %494 = vmatpush.msra.mxu0 0.0
      %495 = vmatpush.msra.mxu0 %v482
      %496 = vmatpush.msra.mxu0 %v285
      %497 = vmatpush.msra.mxu0 %v284
      %498 = vmatpush.msra.mxu0 %v283
      %499 = vmatpush.msra.mxu0 %v282
      %500 = vmatmul.f32.gmra.mxu0 %v289
      %v501 = vpop.f32.mrf.mxu0
      %v502 = vadd.f32 0.0, %v501
      %503 = vmatmul.f32.gmra.mxu0 %v292
      %v504 = vpop.f32.mrf.mxu0
      %v505 = vadd.f32 0.0, %v504
      %506 = vmatmul.f32.gmra.mxu0 %v295
      %v507 = vpop.f32.mrf.mxu0
      %v508 = vadd.f32 0.0, %v507
      %509 = vmatmul.f32.gmra.mxu0 %v298
      %v510 = vpop.f32.mrf.mxu0
      %v511 = vadd.f32 0.0, %v510
      %512 = vmatmul.f32.gmra.mxu0 %v301
      %v513 = vpop.f32.mrf.mxu0
      %v514 = vadd.f32 0.0, %v513
      %515 = vmatmul.f32.gmra.mxu0 %v304
      %v516 = vpop.f32.mrf.mxu0
      %v517 = vadd.f32 0.0, %v516
      %518 = vmatmul.f32.gmra.mxu0 %v307
      %v519 = vpop.f32.mrf.mxu0
      %v520 = vadd.f32 0.0, %v519
      %521 = vmatmul.f32.gmra.mxu0 %v310
      %v522 = vpop.f32.mrf.mxu0
      %v523 = vadd.f32 0.0, %v522
      %524 = vmatmul.f32.gmra.mxu0 %v313
      %v525 = vpop.f32.mrf.mxu0
      %v526 = vadd.f32 0.0, %v525
      %527 = vmatmul.f32.gmra.mxu0 %v316
      %v528 = vpop.f32.mrf.mxu0
      %v529 = vadd.f32 0.0, %v528
      %530 = vmatmul.f32.gmra.mxu0 %v319
      %v531 = vpop.f32.mrf.mxu0
      %v532 = vadd.f32 0.0, %v531
      %533 = vmatmul.f32.gmra.mxu0 %v322
      %v534 = vpop.f32.mrf.mxu0
      %v535 = vadd.f32 0.0, %v534
      %536 = vmatmul.f32.gmra.mxu0 %v325
      %v537 = vpop.f32.mrf.mxu0
      %v538 = vadd.f32 0.0, %v537
      %539 = vmatmul.f32.gmra.mxu0 %v328
      %v540 = vpop.f32.mrf.mxu0
      %v541 = vadd.f32 0.0, %v540
      %542 = vmatmul.f32.gmra.mxu0 %v331
      %v543 = vpop.f32.mrf.mxu0
      %v544 = vadd.f32 0.0, %v543
      %545 = vmatmul.f32.gmra.mxu0 %v334
      %v546 = vpop.f32.mrf.mxu0
      %v547 = vadd.f32 0.0, %v546
      %548 = vmatmul.f32.gmra.mxu0 %v337
      %v549 = vpop.f32.mrf.mxu0
      %v550 = vadd.f32 0.0, %v549
      %551 = vmatmul.f32.gmra.mxu0 %v340
      %v552 = vpop.f32.mrf.mxu0
      %v553 = vadd.f32 0.0, %v552
      %554 = vmatmul.f32.gmra.mxu0 %v343
      %v555 = vpop.f32.mrf.mxu0
      %v556 = vadd.f32 0.0, %v555
      %557 = vmatmul.f32.gmra.mxu0 %v346
      %v558 = vpop.f32.mrf.mxu0
      %v559 = vadd.f32 0.0, %v558
      %560 = vmatmul.f32.gmra.mxu0 %v349
      %v561 = vpop.f32.mrf.mxu0
      %v562 = vadd.f32 0.0, %v561
      %563 = vmatmul.f32.gmra.mxu0 %v352
      %v564 = vpop.f32.mrf.mxu0
      %v565 = vadd.f32 0.0, %v564
      %566 = vmatmul.f32.gmra.mxu0 %v355
      %v567 = vpop.f32.mrf.mxu0
      %v568 = vadd.f32 0.0, %v567
      %569 = vmatmul.f32.gmra.mxu0 %v358
      %v570 = vpop.f32.mrf.mxu0
      %v571 = vadd.f32 0.0, %v570
      %572 = vmatmul.f32.gmra.mxu0 %v361
      %v573 = vpop.f32.mrf.mxu0
      %v574 = vadd.f32 0.0, %v573
      %575 = vmatmul.f32.gmra.mxu0 %v364
      %v576 = vpop.f32.mrf.mxu0
      %v577 = vadd.f32 0.0, %v576
      %578 = vmatmul.f32.gmra.mxu0 %v367
      %v579 = vpop.f32.mrf.mxu0
      %v580 = vadd.f32 0.0, %v579
      %581 = vmatmul.f32.gmra.mxu0 %v370
      %v582 = vpop.f32.mrf.mxu0
      %v583 = vadd.f32 0.0, %v582
      %584 = vmatmul.f32.gmra.mxu0 %v373
      %v585 = vpop.f32.mrf.mxu0
      %v586 = vadd.f32 0.0, %v585
      %587 = vmatmul.f32.gmra.mxu0 %v376
      %v588 = vpop.f32.mrf.mxu0
      %v589 = vadd.f32 0.0, %v588
      %590 = vmatmul.f32.gmra.mxu0 %v379
      %v591 = vpop.f32.mrf.mxu0
      %v592 = vadd.f32 0.0, %v591
      %593 = vmatmul.f32.gmra.mxu0 %v382
      %v594 = vpop.f32.mrf.mxu0
      %v595 = vadd.f32 0.0, %v594
      %596 = vmatmul.f32.gmra.mxu0 %v385
      %v597 = vpop.f32.mrf.mxu0
      %v598 = vadd.f32 0.0, %v597
      %599 = vmatmul.f32.gmra.mxu0 %v388
      %v600 = vpop.f32.mrf.mxu0
      %v601 = vadd.f32 0.0, %v600
      %602 = vmatmul.f32.gmra.mxu0 %v391
      %v603 = vpop.f32.mrf.mxu0
      %v604 = vadd.f32 0.0, %v603
      %605 = vmatmul.f32.gmra.mxu0 %v394
      %v606 = vpop.f32.mrf.mxu0
      %v607 = vadd.f32 0.0, %v606
      %608 = vmatmul.f32.gmra.mxu0 %v397
      %v609 = vpop.f32.mrf.mxu0
      %v610 = vadd.f32 0.0, %v609
      %611 = vmatmul.f32.gmra.mxu0 %v400
      %v612 = vpop.f32.mrf.mxu0
      %v613 = vadd.f32 0.0, %v612
      %614 = vmatmul.f32.gmra.mxu0 %v403
      %v615 = vpop.f32.mrf.mxu0
      %v616 = vadd.f32 0.0, %v615
      %617 = vmatmul.f32.gmra.mxu0 %v406
      %v618 = vpop.f32.mrf.mxu0
      %v619 = vadd.f32 0.0, %v618
      %620 = vmatmul.f32.gmra.mxu0 %v409
      %v621 = vpop.f32.mrf.mxu0
      %v622 = vadd.f32 0.0, %v621
      %623 = vmatmul.f32.gmra.mxu0 %v412
      %v624 = vpop.f32.mrf.mxu0
      %v625 = vadd.f32 0.0, %v624
      %626 = vmatmul.f32.gmra.mxu0 %v415
      %v627 = vpop.f32.mrf.mxu0
      %v628 = vadd.f32 0.0, %v627
      %629 = vmatmul.f32.gmra.mxu0 %v418
      %v630 = vpop.f32.mrf.mxu0
      %v631 = vadd.f32 0.0, %v630
      %632 = vmatmul.f32.gmra.mxu0 %v421
      %v633 = vpop.f32.mrf.mxu0
      %v634 = vadd.f32 0.0, %v633
      %635 = vmatmul.f32.gmra.mxu0 %v424
      %v636 = vpop.f32.mrf.mxu0
      %v637 = vadd.f32 0.0, %v636
      %638 = vmatmul.f32.gmra.mxu0 %v427
      %v639 = vpop.f32.mrf.mxu0
      %v640 = vadd.f32 0.0, %v639
      %641 = vmatmul.f32.gmra.mxu0 %v430
      %v642 = vpop.f32.mrf.mxu0
      %v643 = vadd.f32 0.0, %v642
      %644 = vmatmul.f32.gmra.mxu0 %v433
      %v645 = vpop.f32.mrf.mxu0
      %v646 = vadd.f32 0.0, %v645
      %647 = vmatmul.f32.gmra.mxu0 %v436
      %v648 = vpop.f32.mrf.mxu0
      %v649 = vadd.f32 0.0, %v648
      %650 = vmatmul.f32.gmra.mxu0 %v439
      %v651 = vpop.f32.mrf.mxu0
      %v652 = vadd.f32 0.0, %v651
      %653 = vmatmul.f32.gmra.mxu0 %v442
      %v654 = vpop.f32.mrf.mxu0
      %v655 = vadd.f32 0.0, %v654
      %656 = vmatmul.f32.gmra.mxu0 %v445
      %v657 = vpop.f32.mrf.mxu0
      %v658 = vadd.f32 0.0, %v657
      %659 = vmatmul.f32.gmra.mxu0 %v448
      %v660 = vpop.f32.mrf.mxu0
      %v661 = vadd.f32 0.0, %v660
      %662 = vmatmul.f32.gmra.mxu0 %v451
      %v663 = vpop.f32.mrf.mxu0
      %v664 = vadd.f32 0.0, %v663
      %665 = vmatmul.f32.gmra.mxu0 %v454
      %v666 = vpop.f32.mrf.mxu0
      %v667 = vadd.f32 0.0, %v666
      %668 = vmatmul.f32.gmra.mxu0 %v457
      %v669 = vpop.f32.mrf.mxu0
      %v670 = vadd.f32 0.0, %v669
      %671 = vmatmul.f32.gmra.mxu0 %v460
      %v672 = vpop.f32.mrf.mxu0
      %v673 = vadd.f32 0.0, %v672
      %674 = vmatmul.f32.gmra.mxu0 %v463
      %v675 = vpop.f32.mrf.mxu0
      %v676 = vadd.f32 0.0, %v675
      %677 = vmatmul.f32.gmra.mxu0 %v466
      %v678 = vpop.f32.mrf.mxu0
      %v679 = vadd.f32 0.0, %v678
      %680 = vmatmul.f32.gmra.mxu0 %v469
      %v681 = vpop.f32.mrf.mxu0
      %v682 = vadd.f32 0.0, %v681
      %683 = vmatmul.f32.gmra.mxu0 %v472
      %v684 = vpop.f32.mrf.mxu0
      %v685 = vadd.f32 0.0, %v684
      %686 = vmatmul.f32.gmra.mxu0 %v475
      %v687 = vpop.f32.mrf.mxu0
      %v688 = vadd.f32 0.0, %v687
      %689 = vmatmul.f32.gmra.mxu0 %v478
      %v690 = vpop.f32.mrf.mxu0
      %v691 = vadd.f32 0.0, %v690
      %692 = vdwg.mxu0
      %p693 = scmp.eq.s32.totalorder %s19, 0
      // Predicated region
      $region37: #{tpu_custom_call.1} parent=35 // pred_check
        %p694 = pneg %p693
      $region38: #{tpu_custom_call.1} parent=35 // pred_check_branch
        %696 = sbr.rel (%p694) target = $region40
      $region39: #{tpu_custom_call.1} parent=35 // pred_region
        %p697 = scmp.eq.s32.totalorder %s20, 0
        // Predicated region
        $region41: #{tpu_custom_call.1} parent=39 // pred_check
          %p698 = pneg %p697
        $region42: #{tpu_custom_call.1} parent=39 // pred_check_branch
          %700 = sbr.rel (%p698) target = $region44
        $region43: #{tpu_custom_call.1} parent=39 // pred_region
          %vm701 = vcmask 253952
          %702 = vst.msk [vmem:[#allocation2] sm:$0x1] %vm701, 0.0
          %703 = vst.msk [vmem:[#allocation3] sm:$0x1] %vm701, 0.0
        $region44: #{tpu_custom_call.1} parent=39 // pred_fallthru
          _
        %v704 = vld [vmem:[#allocation2] sm:$0x1]
        %vm705 = vcmask 261120
        %v706 = vsel %vm705, %v502, 0.0
        %v707 = vsel %vm705, %v505, 0.0
        %v708 = vadd.f32 %v706, %v707
        %v709 = vsel %vm705, %v508, 0.0
        %v710 = vadd.f32 %v708, %v709
        %v711 = vsel %vm705, %v511, 0.0
        %v712 = vadd.f32 %v710, %v711
        %v713 = vsel %vm705, %v514, 0.0
        %v714 = vadd.f32 %v712, %v713
        %v715 = vsel %vm705, %v517, 0.0
        %v716 = vadd.f32 %v714, %v715
        %v717 = vsel %vm705, %v520, 0.0
        %v718 = vadd.f32 %v716, %v717
        %v719 = vsel %vm705, %v523, 0.0
        %v720 = vadd.f32 %v718, %v719
        %v721 = vsel %vm705, %v526, 0.0
        %v722 = vadd.f32 %v720, %v721
        %v723 = vsel %vm705, %v529, 0.0
        %v724 = vadd.f32 %v722, %v723
        %v725 = vsel %vm705, %v532, 0.0
        %v726 = vadd.f32 %v724, %v725
        %v727 = vsel %vm705, %v535, 0.0
        %v728 = vadd.f32 %v726, %v727
        %v729 = vsel %vm705, %v538, 0.0
        %v730 = vadd.f32 %v728, %v729
        %v731 = vsel %vm705, %v541, 0.0
        %v732 = vadd.f32 %v730, %v731
        %v733 = vsel %vm705, %v544, 0.0
        %v734 = vadd.f32 %v732, %v733
        %v735 = vsel %vm705, %v547, 0.0
        %v736 = vadd.f32 %v734, %v735
        %v737 = vsel %vm705, %v550, 0.0
        %v738 = vadd.f32 %v736, %v737
        %v739 = vsel %vm705, %v553, 0.0
        %v740 = vadd.f32 %v738, %v739
        %v741 = vsel %vm705, %v556, 0.0
        %v742 = vadd.f32 %v740, %v741
        %v743 = vsel %vm705, %v559, 0.0
        %v744 = vadd.f32 %v742, %v743
        %v745 = vsel %vm705, %v562, 0.0
        %v746 = vadd.f32 %v744, %v745
        %v747 = vsel %vm705, %v565, 0.0
        %v748 = vadd.f32 %v746, %v747
        %v749 = vsel %vm705, %v568, 0.0
        %v750 = vadd.f32 %v748, %v749
        %v751 = vsel %vm705, %v571, 0.0
        %v752 = vadd.f32 %v750, %v751
        %v753 = vsel %vm705, %v574, 0.0
        %v754 = vadd.f32 %v752, %v753
        %v755 = vsel %vm705, %v577, 0.0
        %v756 = vadd.f32 %v754, %v755
        %v757 = vsel %vm705, %v580, 0.0
        %v758 = vadd.f32 %v756, %v757
        %v759 = vsel %vm705, %v583, 0.0
        %v760 = vadd.f32 %v758, %v759
        %v761 = vsel %vm705, %v586, 0.0
        %v762 = vadd.f32 %v760, %v761
        %v763 = vsel %vm705, %v589, 0.0
        %v764 = vadd.f32 %v762, %v763
        %v765 = vsel %vm705, %v592, 0.0
        %v766 = vadd.f32 %v764, %v765
        %v767 = vsel %vm705, %v595, 0.0
        %v768 = vadd.f32 %v766, %v767
        %v769 = vsel %vm705, %v598, 0.0
        %v770 = vadd.f32 %v768, %v769
        %v771 = vsel %vm705, %v601, 0.0
        %v772 = vadd.f32 %v770, %v771
        %v773 = vsel %vm705, %v604, 0.0
        %v774 = vadd.f32 %v772, %v773
        %v775 = vsel %vm705, %v607, 0.0
        %v776 = vadd.f32 %v774, %v775
        %v777 = vsel %vm705, %v610, 0.0
        %v778 = vadd.f32 %v776, %v777
        %v779 = vsel %vm705, %v613, 0.0
        %v780 = vadd.f32 %v778, %v779
        %v781 = vsel %vm705, %v616, 0.0
        %v782 = vadd.f32 %v780, %v781
        %v783 = vsel %vm705, %v619, 0.0
        %v784 = vadd.f32 %v782, %v783
        %v785 = vsel %vm705, %v622, 0.0
        %v786 = vadd.f32 %v784, %v785
        %v787 = vsel %vm705, %v625, 0.0
        %v788 = vadd.f32 %v786, %v787
        %v789 = vsel %vm705, %v628, 0.0
        %v790 = vadd.f32 %v788, %v789
        %v791 = vsel %vm705, %v631, 0.0
        %v792 = vadd.f32 %v790, %v791
        %v793 = vsel %vm705, %v634, 0.0
        %v794 = vadd.f32 %v792, %v793
        %v795 = vsel %vm705, %v637, 0.0
        %v796 = vadd.f32 %v794, %v795
        %v797 = vsel %vm705, %v640, 0.0
        %v798 = vadd.f32 %v796, %v797
        %v799 = vsel %vm705, %v643, 0.0
        %v800 = vadd.f32 %v798, %v799
        %v801 = vsel %vm705, %v646, 0.0
        %v802 = vadd.f32 %v800, %v801
        %v803 = vsel %vm705, %v649, 0.0
        %v804 = vadd.f32 %v802, %v803
        %v805 = vsel %vm705, %v652, 0.0
        %v806 = vadd.f32 %v804, %v805
        %v807 = vsel %vm705, %v655, 0.0
        %v808 = vadd.f32 %v806, %v807
        %v809 = vsel %vm705, %v658, 0.0
        %v810 = vadd.f32 %v808, %v809
        %v811 = vsel %vm705, %v661, 0.0
        %v812 = vadd.f32 %v810, %v811
        %v813 = vsel %vm705, %v664, 0.0
        %v814 = vadd.f32 %v812, %v813
        %v815 = vsel %vm705, %v667, 0.0
        %v816 = vadd.f32 %v814, %v815
        %v817 = vsel %vm705, %v670, 0.0
        %v818 = vadd.f32 %v816, %v817
        %v819 = vsel %vm705, %v673, 0.0
        %v820 = vadd.f32 %v818, %v819
        %v821 = vsel %vm705, %v676, 0.0
        %v822 = vadd.f32 %v820, %v821
        %v823 = vsel %vm705, %v679, 0.0
        %v824 = vadd.f32 %v822, %v823
        %v825 = vsel %vm705, %v682, 0.0
        %v826 = vadd.f32 %v824, %v825
        %v827 = vsel %vm705, %v685, 0.0
        %v828 = vadd.f32 %v826, %v827
        %v829 = vsel %vm705, %v688, 0.0
        %v830 = vadd.f32 %v828, %v829
        %v831 = vsel %vm705, %v691, 0.0
        %v832 = vadd.f32 %v830, %v831
        %v833 = vrot.slane %v832, 4
        %v834 = vadd.f32 %v832, %v833
        %v835 = vrot.slane %v834, 2
        %v836 = vadd.f32 %v834, %v835
        %v837 = vrot.slane %v836, 1
        %v838 = vadd.f32 %v836, %v837
        %v839 = vadd.f32 %v704, %v838
        %vm840 = vcmask 253952
        %841 = vst.msk [vmem:[#allocation2] sm:$0x1] %vm840, %v839
        %v842 = vld [vmem:[#allocation3] sm:$0x1]
        %v843 = vmul.f32 %v502, %v502
        %v844 = vmul.f32 %v505, %v505
        %v845 = vmul.f32 %v508, %v508
        %v846 = vmul.f32 %v511, %v511
        %v847 = vmul.f32 %v514, %v514
        %v848 = vmul.f32 %v517, %v517
        %v849 = vmul.f32 %v520, %v520
        %v850 = vmul.f32 %v523, %v523
        %v851 = vmul.f32 %v526, %v526
        %v852 = vmul.f32 %v529, %v529
        %v853 = vmul.f32 %v532, %v532
        %v854 = vmul.f32 %v535, %v535
        %v855 = vmul.f32 %v538, %v538
        %v856 = vmul.f32 %v541, %v541
        %v857 = vmul.f32 %v544, %v544
        %v858 = vmul.f32 %v547, %v547
        %v859 = vmul.f32 %v550, %v550
        %v860 = vmul.f32 %v553, %v553
        %v861 = vmul.f32 %v556, %v556
        %v862 = vmul.f32 %v559, %v559
        %v863 = vmul.f32 %v562, %v562
        %v864 = vmul.f32 %v565, %v565
        %v865 = vmul.f32 %v568, %v568
        %v866 = vmul.f32 %v571, %v571
        %v867 = vmul.f32 %v574, %v574
        %v868 = vmul.f32 %v577, %v577
        %v869 = vmul.f32 %v580, %v580
        %v870 = vmul.f32 %v583, %v583
        %v871 = vmul.f32 %v586, %v586
        %v872 = vmul.f32 %v589, %v589
        %v873 = vmul.f32 %v592, %v592
        %v874 = vmul.f32 %v595, %v595
        %v875 = vmul.f32 %v598, %v598
        %v876 = vmul.f32 %v601, %v601
        %v877 = vmul.f32 %v604, %v604
        %v878 = vmul.f32 %v607, %v607
        %v879 = vmul.f32 %v610, %v610
        %v880 = vmul.f32 %v613, %v613
        %v881 = vmul.f32 %v616, %v616
        %v882 = vmul.f32 %v619, %v619
        %v883 = vmul.f32 %v622, %v622
        %v884 = vmul.f32 %v625, %v625
        %v885 = vmul.f32 %v628, %v628
        %v886 = vmul.f32 %v631, %v631
        %v887 = vmul.f32 %v634, %v634
        %v888 = vmul.f32 %v637, %v637
        %v889 = vmul.f32 %v640, %v640
        %v890 = vmul.f32 %v643, %v643
        %v891 = vmul.f32 %v646, %v646
        %v892 = vmul.f32 %v649, %v649
        %v893 = vmul.f32 %v652, %v652
        %v894 = vmul.f32 %v655, %v655
        %v895 = vmul.f32 %v658, %v658
        %v896 = vmul.f32 %v661, %v661
        %v897 = vmul.f32 %v664, %v664
        %v898 = vmul.f32 %v667, %v667
        %v899 = vmul.f32 %v670, %v670
        %v900 = vmul.f32 %v673, %v673
        %v901 = vmul.f32 %v676, %v676
        %v902 = vmul.f32 %v679, %v679
        %v903 = vmul.f32 %v682, %v682
        %v904 = vmul.f32 %v685, %v685
        %v905 = vmul.f32 %v688, %v688
        %v906 = vmul.f32 %v691, %v691
        %v907 = vsel %vm705, %v843, 0.0
        %v908 = vsel %vm705, %v844, 0.0
        %v909 = vadd.f32 %v907, %v908
        %v910 = vsel %vm705, %v845, 0.0
        %v911 = vadd.f32 %v909, %v910
        %v912 = vsel %vm705, %v846, 0.0
        %v913 = vadd.f32 %v911, %v912
        %v914 = vsel %vm705, %v847, 0.0
        %v915 = vadd.f32 %v913, %v914
        %v916 = vsel %vm705, %v848, 0.0
        %v917 = vadd.f32 %v915, %v916
        %v918 = vsel %vm705, %v849, 0.0
        %v919 = vadd.f32 %v917, %v918
        %v920 = vsel %vm705, %v850, 0.0
        %v921 = vadd.f32 %v919, %v920
        %v922 = vsel %vm705, %v851, 0.0
        %v923 = vadd.f32 %v921, %v922
        %v924 = vsel %vm705, %v852, 0.0
        %v925 = vadd.f32 %v923, %v924
        %v926 = vsel %vm705, %v853, 0.0
        %v927 = vadd.f32 %v925, %v926
        %v928 = vsel %vm705, %v854, 0.0
        %v929 = vadd.f32 %v927, %v928
        %v930 = vsel %vm705, %v855, 0.0
        %v931 = vadd.f32 %v929, %v930
        %v932 = vsel %vm705, %v856, 0.0
        %v933 = vadd.f32 %v931, %v932
        %v934 = vsel %vm705, %v857, 0.0
        %v935 = vadd.f32 %v933, %v934
        %v936 = vsel %vm705, %v858, 0.0
        %v937 = vadd.f32 %v935, %v936
        %v938 = vsel %vm705, %v859, 0.0
        %v939 = vadd.f32 %v937, %v938
        %v940 = vsel %vm705, %v860, 0.0
        %v941 = vadd.f32 %v939, %v940
        %v942 = vsel %vm705, %v861, 0.0
        %v943 = vadd.f32 %v941, %v942
        %v944 = vsel %vm705, %v862, 0.0
        %v945 = vadd.f32 %v943, %v944
        %v946 = vsel %vm705, %v863, 0.0
        %v947 = vadd.f32 %v945, %v946
        %v948 = vsel %vm705, %v864, 0.0
        %v949 = vadd.f32 %v947, %v948
        %v950 = vsel %vm705, %v865, 0.0
        %v951 = vadd.f32 %v949, %v950
        %v952 = vsel %vm705, %v866, 0.0
        %v953 = vadd.f32 %v951, %v952
        %v954 = vsel %vm705, %v867, 0.0
        %v955 = vadd.f32 %v953, %v954
        %v956 = vsel %vm705, %v868, 0.0
        %v957 = vadd.f32 %v955, %v956
        %v958 = vsel %vm705, %v869, 0.0
        %v959 = vadd.f32 %v957, %v958
        %v960 = vsel %vm705, %v870, 0.0
        %v961 = vadd.f32 %v959, %v960
        %v962 = vsel %vm705, %v871, 0.0
        %v963 = vadd.f32 %v961, %v962
        %v964 = vsel %vm705, %v872, 0.0
        %v965 = vadd.f32 %v963, %v964
        %v966 = vsel %vm705, %v873, 0.0
        %v967 = vadd.f32 %v965, %v966
        %v968 = vsel %vm705, %v874, 0.0
        %v969 = vadd.f32 %v967, %v968
        %v970 = vsel %vm705, %v875, 0.0
        %v971 = vadd.f32 %v969, %v970
        %v972 = vsel %vm705, %v876, 0.0
        %v973 = vadd.f32 %v971, %v972
        %v974 = vsel %vm705, %v877, 0.0
        %v975 = vadd.f32 %v973, %v974
        %v976 = vsel %vm705, %v878, 0.0
        %v977 = vadd.f32 %v975, %v976
        %v978 = vsel %vm705, %v879, 0.0
        %v979 = vadd.f32 %v977, %v978
        %v980 = vsel %vm705, %v880, 0.0
        %v981 = vadd.f32 %v979, %v980
        %v982 = vsel %vm705, %v881, 0.0
        %v983 = vadd.f32 %v981, %v982
        %v984 = vsel %vm705, %v882, 0.0
        %v985 = vadd.f32 %v983, %v984
        %v986 = vsel %vm705, %v883, 0.0
        %v987 = vadd.f32 %v985, %v986
        %v988 = vsel %vm705, %v884, 0.0
        %v989 = vadd.f32 %v987, %v988
        %v990 = vsel %vm705, %v885, 0.0
        %v991 = vadd.f32 %v989, %v990
        %v992 = vsel %vm705, %v886, 0.0
        %v993 = vadd.f32 %v991, %v992
        %v994 = vsel %vm705, %v887, 0.0
        %v995 = vadd.f32 %v993, %v994
        %v996 = vsel %vm705, %v888, 0.0
        %v997 = vadd.f32 %v995, %v996
        %v998 = vsel %vm705, %v889, 0.0
        %v999 = vadd.f32 %v997, %v998
        %v1000 = vsel %vm705, %v890, 0.0
        %v1001 = vadd.f32 %v999, %v1000
        %v1002 = vsel %vm705, %v891, 0.0
        %v1003 = vadd.f32 %v1001, %v1002
        %v1004 = vsel %vm705, %v892, 0.0
        %v1005 = vadd.f32 %v1003, %v1004
        %v1006 = vsel %vm705, %v893, 0.0
        %v1007 = vadd.f32 %v1005, %v1006
        %v1008 = vsel %vm705, %v894, 0.0
        %v1009 = vadd.f32 %v1007, %v1008
        %v1010 = vsel %vm705, %v895, 0.0
        %v1011 = vadd.f32 %v1009, %v1010
        %v1012 = vsel %vm705, %v896, 0.0
        %v1013 = vadd.f32 %v1011, %v1012
        %v1014 = vsel %vm705, %v897, 0.0
        %v1015 = vadd.f32 %v1013, %v1014
        %v1016 = vsel %vm705, %v898, 0.0
        %v1017 = vadd.f32 %v1015, %v1016
        %v1018 = vsel %vm705, %v899, 0.0
        %v1019 = vadd.f32 %v1017, %v1018
        %v1020 = vsel %vm705, %v900, 0.0
        %v1021 = vadd.f32 %v1019, %v1020
        %v1022 = vsel %vm705, %v901, 0.0
        %v1023 = vadd.f32 %v1021, %v1022
        %v1024 = vsel %vm705, %v902, 0.0
        %v1025 = vadd.f32 %v1023, %v1024
        %v1026 = vsel %vm705, %v903, 0.0
        %v1027 = vadd.f32 %v1025, %v1026
        %v1028 = vsel %vm705, %v904, 0.0
        %v1029 = vadd.f32 %v1027, %v1028
        %v1030 = vsel %vm705, %v905, 0.0
        %v1031 = vadd.f32 %v1029, %v1030
        %v1032 = vsel %vm705, %v906, 0.0
        %v1033 = vadd.f32 %v1031, %v1032
        %v1034 = vrot.slane %v1033, 4
        %v1035 = vadd.f32 %v1033, %v1034
        %v1036 = vrot.slane %v1035, 2
        %v1037 = vadd.f32 %v1035, %v1036
        %v1038 = vrot.slane %v1037, 1
        %v1039 = vadd.f32 %v1037, %v1038
        %v1040 = vadd.f32 %v842, %v1039
        %1041 = vst.msk [vmem:[#allocation3] sm:$0x1] %vm840, %v1040
      $region40: #{tpu_custom_call.1} parent=35 // pred_fallthru
        _
      %p1042 = scmp.eq.s32.totalorder %s19, 1
      %p1043 = scmp.eq.s32.totalorder %s20, 0
      %p1044 = pnand %p1042, %p1043
      %p1045 = pneg %p1044
      // Predicated region
      $region45: #{tpu_custom_call.1} parent=35 // pred_check
        _
      $region46: #{tpu_custom_call.1} parent=35 // pred_check_branch
        %1047 = sbr.rel (%p1044) target = $region48
      $region47: #{tpu_custom_call.1} parent=35 // pred_region
        %v1048 = vld [vmem:[#allocation2] sm:$0x1]
        %v1049 = vld [vmem:[%s2] sm:$0xff]
        %v1050 = vld [vmem:[%s2 + $0x8] sm:$0xff]
        %v1051 = vld [vmem:[%s2 + $0x10] sm:$0xff]
        %v1052 = vld [vmem:[%s2 + $0x18] sm:$0xff]
        %vm1053 = vcmask 261120
        %v1055 = vsel %vm1053, %v1048, 0
        %1057 = vmatpush.msra.mxu0 0.0
        %1058 = vmatpush.msra.mxu0 0.0
        %1059 = vmatpush.msra.mxu0 0.0
        %1060 = vmatpush.msra.mxu0 0.0
        %1061 = vmatpush.msra.mxu0 0.0
        %1062 = vmatpush.msra.mxu0 0.0
        %1063 = vmatpush.msra.mxu0 0.0
        %1064 = vmatpush.msra.mxu0 0.0
        %1065 = vmatpush.msra.mxu0 0.0
        %1066 = vmatpush.msra.mxu0 0.0
        %1067 = vmatpush.msra.mxu0 0.0
        %1068 = vmatpush.msra.mxu0 0.0
        %1069 = vmatpush.msra.mxu0 %v1052
        %1070 = vmatpush.msra.mxu0 %v1051
        %1071 = vmatpush.msra.mxu0 %v1050
        %1072 = vmatpush.msra.mxu0 %v1049
        %1073 = vmatmul.f32.gmra.mxu0 %v1055
        %v1074 = vpop.f32.mrf.mxu0
        %v1075 = vadd.f32 0.0, %v1074
        %1076 = vdwg.mxu0
        %v1077 = vld [vmem:[#allocation3] sm:$0x1]
        %v1079 = vsel %vm1053, %v1077, 0
        %1081 = vmatpush.msra.mxu0 0.0
        %1082 = vmatpush.msra.mxu0 0.0
        %1083 = vmatpush.msra.mxu0 0.0
        %1084 = vmatpush.msra.mxu0 0.0
        %1085 = vmatpush.msra.mxu0 0.0
        %1086 = vmatpush.msra.mxu0 0.0
        %1087 = vmatpush.msra.mxu0 0.0
        %1088 = vmatpush.msra.mxu0 0.0
        %1089 = vmatpush.msra.mxu0 0.0
        %1090 = vmatpush.msra.mxu0 0.0
        %1091 = vmatpush.msra.mxu0 0.0
        %1092 = vmatpush.msra.mxu0 0.0
        %1093 = vmatpush.msra.mxu0 %v1052
        %1094 = vmatpush.msra.mxu0 %v1051
        %1095 = vmatpush.msra.mxu0 %v1050
        %1096 = vmatpush.msra.mxu0 %v1049
        %1097 = vmatmul.f32.gmra.mxu0 %v1079
        %v1098 = vpop.f32.mrf.mxu0
        %v1099 = vadd.f32 0.0, %v1098
        %1100 = vdwg.mxu0
        %v1101 = vmul.f32 %v1075, 0.00048828125
        %v1102 = vmul.f32 %v1099, 0.00048828125
        %v1103 = vmul.f32 %v1101, %v1101
        %v1104 = vsub.f32 %v1102, %v1103
        %v1105 = vmax.f32 %v1104, 0.0
        %v1106 = vld [vmem:[%s3] sm:$0x1]
        %v1107 = vld [vmem:[%s3 + $0x1] sm:$0x1]
        %v1108 = vadd.f32 %v1105, 1e-05
        %v1109 = vrsqrt.pop %v1108
        %v1110 = vmul.f32 %v1109, %v1108
        %v1111 = vmul.f32 %v1110, %v1109
        %v1112 = vmul.f32 0.5, %v1111
        %v1113 = vsub.f32 1.5, %v1112
        %v1114 = vmul.f32 %v1109, %v1113
        %vm1115 = vweird.f32 %v1108
        %vm1116 = vweird.f32 %v1109
        %vm1117 = vmor %vm1115, %vm1116
        %v1118 = vsel %vm1117, %v1109, %v1114
        %v1119 = vmul.f32 %v1106, %v1118
        %vm1120 = vcmask 253952
        %1121 = vst.msk [vmem:[#allocation4] sm:$0x1] %vm1120, %v1119
        %v1122 = vmul.f32 %v1101, %v1119
        %v1123 = vsub.f32 %v1107, %v1122
        %1124 = vst.msk [vmem:[#allocation5] sm:$0x1] %vm1120, %v1123
      $region48: #{tpu_custom_call.1} parent=35 // pred_fallthru
        _
      // Predicated region
      $region49: #{tpu_custom_call.1} parent=35 // pred_check
        %p1125 = pneg %p1042
      $region50: #{tpu_custom_call.1} parent=35 // pred_check_branch
        %1127 = sbr.rel (%p1125) target = $region52
      $region51: #{tpu_custom_call.1} parent=35 // pred_region
        %v1128 = vld [vmem:[#allocation4] sm:$0x1]
        %v1130 = vperm.slane %v1128, 0
        %v1132 = vmul.f32 %v502, %v1130
        %v1133 = vmul.f32 %v505, %v1130
        %v1134 = vmul.f32 %v508, %v1130
        %v1135 = vmul.f32 %v511, %v1130
        %v1136 = vmul.f32 %v514, %v1130
        %v1137 = vmul.f32 %v517, %v1130
        %v1138 = vmul.f32 %v520, %v1130
        %v1139 = vmul.f32 %v523, %v1130
        %v1140 = vmul.f32 %v526, %v1130
        %v1141 = vmul.f32 %v529, %v1130
        %v1142 = vmul.f32 %v532, %v1130
        %v1143 = vmul.f32 %v535, %v1130
        %v1144 = vmul.f32 %v538, %v1130
        %v1145 = vmul.f32 %v541, %v1130
        %v1146 = vmul.f32 %v544, %v1130
        %v1147 = vmul.f32 %v547, %v1130
        %v1148 = vmul.f32 %v550, %v1130
        %v1149 = vmul.f32 %v553, %v1130
        %v1150 = vmul.f32 %v556, %v1130
        %v1151 = vmul.f32 %v559, %v1130
        %v1152 = vmul.f32 %v562, %v1130
        %v1153 = vmul.f32 %v565, %v1130
        %v1154 = vmul.f32 %v568, %v1130
        %v1155 = vmul.f32 %v571, %v1130
        %v1156 = vmul.f32 %v574, %v1130
        %v1157 = vmul.f32 %v577, %v1130
        %v1158 = vmul.f32 %v580, %v1130
        %v1159 = vmul.f32 %v583, %v1130
        %v1160 = vmul.f32 %v586, %v1130
        %v1161 = vmul.f32 %v589, %v1130
        %v1162 = vmul.f32 %v592, %v1130
        %v1163 = vmul.f32 %v595, %v1130
        %v1164 = vmul.f32 %v598, %v1130
        %v1165 = vmul.f32 %v601, %v1130
        %v1166 = vmul.f32 %v604, %v1130
        %v1167 = vmul.f32 %v607, %v1130
        %v1168 = vmul.f32 %v610, %v1130
        %v1169 = vmul.f32 %v613, %v1130
        %v1170 = vmul.f32 %v616, %v1130
        %v1171 = vmul.f32 %v619, %v1130
        %v1172 = vmul.f32 %v622, %v1130
        %v1173 = vmul.f32 %v625, %v1130
        %v1174 = vmul.f32 %v628, %v1130
        %v1175 = vmul.f32 %v631, %v1130
        %v1176 = vmul.f32 %v634, %v1130
        %v1177 = vmul.f32 %v637, %v1130
        %v1178 = vmul.f32 %v640, %v1130
        %v1179 = vmul.f32 %v643, %v1130
        %v1180 = vmul.f32 %v646, %v1130
        %v1181 = vmul.f32 %v649, %v1130
        %v1182 = vmul.f32 %v652, %v1130
        %v1183 = vmul.f32 %v655, %v1130
        %v1184 = vmul.f32 %v658, %v1130
        %v1185 = vmul.f32 %v661, %v1130
        %v1186 = vmul.f32 %v664, %v1130
        %v1187 = vmul.f32 %v667, %v1130
        %v1188 = vmul.f32 %v670, %v1130
        %v1189 = vmul.f32 %v673, %v1130
        %v1190 = vmul.f32 %v676, %v1130
        %v1191 = vmul.f32 %v679, %v1130
        %v1192 = vmul.f32 %v682, %v1130
        %v1193 = vmul.f32 %v685, %v1130
        %v1194 = vmul.f32 %v688, %v1130
        %v1195 = vmul.f32 %v691, %v1130
        %v1196 = vld [vmem:[#allocation5] sm:$0x1]
        %v1198 = vperm.slane %v1196, 0
        %v1200 = vadd.f32 %v1132, %v1198
        %v1201 = vadd.f32 %v1133, %v1198
        %v1202 = vadd.f32 %v1134, %v1198
        %v1203 = vadd.f32 %v1135, %v1198
        %v1204 = vadd.f32 %v1136, %v1198
        %v1205 = vadd.f32 %v1137, %v1198
        %v1206 = vadd.f32 %v1138, %v1198
        %v1207 = vadd.f32 %v1139, %v1198
        %v1208 = vadd.f32 %v1140, %v1198
        %v1209 = vadd.f32 %v1141, %v1198
        %v1210 = vadd.f32 %v1142, %v1198
        %v1211 = vadd.f32 %v1143, %v1198
        %v1212 = vadd.f32 %v1144, %v1198
        %v1213 = vadd.f32 %v1145, %v1198
        %v1214 = vadd.f32 %v1146, %v1198
        %v1215 = vadd.f32 %v1147, %v1198
        %v1216 = vadd.f32 %v1148, %v1198
        %v1217 = vadd.f32 %v1149, %v1198
        %v1218 = vadd.f32 %v1150, %v1198
        %v1219 = vadd.f32 %v1151, %v1198
        %v1220 = vadd.f32 %v1152, %v1198
        %v1221 = vadd.f32 %v1153, %v1198
        %v1222 = vadd.f32 %v1154, %v1198
        %v1223 = vadd.f32 %v1155, %v1198
        %v1224 = vadd.f32 %v1156, %v1198
        %v1225 = vadd.f32 %v1157, %v1198
        %v1226 = vadd.f32 %v1158, %v1198
        %v1227 = vadd.f32 %v1159, %v1198
        %v1228 = vadd.f32 %v1160, %v1198
        %v1229 = vadd.f32 %v1161, %v1198
        %v1230 = vadd.f32 %v1162, %v1198
        %v1231 = vadd.f32 %v1163, %v1198
        %v1232 = vadd.f32 %v1164, %v1198
        %v1233 = vadd.f32 %v1165, %v1198
        %v1234 = vadd.f32 %v1166, %v1198
        %v1235 = vadd.f32 %v1167, %v1198
        %v1236 = vadd.f32 %v1168, %v1198
        %v1237 = vadd.f32 %v1169, %v1198
        %v1238 = vadd.f32 %v1170, %v1198
        %v1239 = vadd.f32 %v1171, %v1198
        %v1240 = vadd.f32 %v1172, %v1198
        %v1241 = vadd.f32 %v1173, %v1198
        %v1242 = vadd.f32 %v1174, %v1198
        %v1243 = vadd.f32 %v1175, %v1198
        %v1244 = vadd.f32 %v1176, %v1198
        %v1245 = vadd.f32 %v1177, %v1198
        %v1246 = vadd.f32 %v1178, %v1198
        %v1247 = vadd.f32 %v1179, %v1198
        %v1248 = vadd.f32 %v1180, %v1198
        %v1249 = vadd.f32 %v1181, %v1198
        %v1250 = vadd.f32 %v1182, %v1198
        %v1251 = vadd.f32 %v1183, %v1198
        %v1252 = vadd.f32 %v1184, %v1198
        %v1253 = vadd.f32 %v1185, %v1198
        %v1254 = vadd.f32 %v1186, %v1198
        %v1255 = vadd.f32 %v1187, %v1198
        %v1256 = vadd.f32 %v1188, %v1198
        %v1257 = vadd.f32 %v1189, %v1198
        %v1258 = vadd.f32 %v1190, %v1198
        %v1259 = vadd.f32 %v1191, %v1198
        %v1260 = vadd.f32 %v1192, %v1198
        %v1261 = vadd.f32 %v1193, %v1198
        %v1262 = vadd.f32 %v1194, %v1198
        %v1263 = vadd.f32 %v1195, %v1198
        %v1264 = vmax.f32 %v1200, 0.0
        %v1265 = vmax.f32 %v1201, 0.0
        %v1266 = vmax.f32 %v1202, 0.0
        %v1267 = vmax.f32 %v1203, 0.0
        %v1268 = vmax.f32 %v1204, 0.0
        %v1269 = vmax.f32 %v1205, 0.0
        %v1270 = vmax.f32 %v1206, 0.0
        %v1271 = vmax.f32 %v1207, 0.0
        %v1272 = vmax.f32 %v1208, 0.0
        %v1273 = vmax.f32 %v1209, 0.0
        %v1274 = vmax.f32 %v1210, 0.0
        %v1275 = vmax.f32 %v1211, 0.0
        %v1276 = vmax.f32 %v1212, 0.0
        %v1277 = vmax.f32 %v1213, 0.0
        %v1278 = vmax.f32 %v1214, 0.0
        %v1279 = vmax.f32 %v1215, 0.0
        %v1280 = vmax.f32 %v1216, 0.0
        %v1281 = vmax.f32 %v1217, 0.0
        %v1282 = vmax.f32 %v1218, 0.0
        %v1283 = vmax.f32 %v1219, 0.0
        %v1284 = vmax.f32 %v1220, 0.0
        %v1285 = vmax.f32 %v1221, 0.0
        %v1286 = vmax.f32 %v1222, 0.0
        %v1287 = vmax.f32 %v1223, 0.0
        %v1288 = vmax.f32 %v1224, 0.0
        %v1289 = vmax.f32 %v1225, 0.0
        %v1290 = vmax.f32 %v1226, 0.0
        %v1291 = vmax.f32 %v1227, 0.0
        %v1292 = vmax.f32 %v1228, 0.0
        %v1293 = vmax.f32 %v1229, 0.0
        %v1294 = vmax.f32 %v1230, 0.0
        %v1295 = vmax.f32 %v1231, 0.0
        %v1296 = vmax.f32 %v1232, 0.0
        %v1297 = vmax.f32 %v1233, 0.0
        %v1298 = vmax.f32 %v1234, 0.0
        %v1299 = vmax.f32 %v1235, 0.0
        %v1300 = vmax.f32 %v1236, 0.0
        %v1301 = vmax.f32 %v1237, 0.0
        %v1302 = vmax.f32 %v1238, 0.0
        %v1303 = vmax.f32 %v1239, 0.0
        %v1304 = vmax.f32 %v1240, 0.0
        %v1305 = vmax.f32 %v1241, 0.0
        %v1306 = vmax.f32 %v1242, 0.0
        %v1307 = vmax.f32 %v1243, 0.0
        %v1308 = vmax.f32 %v1244, 0.0
        %v1309 = vmax.f32 %v1245, 0.0
        %v1310 = vmax.f32 %v1246, 0.0
        %v1311 = vmax.f32 %v1247, 0.0
        %v1312 = vmax.f32 %v1248, 0.0
        %v1313 = vmax.f32 %v1249, 0.0
        %v1314 = vmax.f32 %v1250, 0.0
        %v1315 = vmax.f32 %v1251, 0.0
        %v1316 = vmax.f32 %v1252, 0.0
        %v1317 = vmax.f32 %v1253, 0.0
        %v1318 = vmax.f32 %v1254, 0.0
        %v1319 = vmax.f32 %v1255, 0.0
        %v1320 = vmax.f32 %v1256, 0.0
        %v1321 = vmax.f32 %v1257, 0.0
        %v1322 = vmax.f32 %v1258, 0.0
        %v1323 = vmax.f32 %v1259, 0.0
        %v1324 = vmax.f32 %v1260, 0.0
        %v1325 = vmax.f32 %v1261, 0.0
        %v1326 = vmax.f32 %v1262, 0.0
        %v1327 = vmax.f32 %v1263, 0.0
        %vm1328 = vcmask 261120
        %1329 = vst.msk [vmem:[%s215] sm:$0xff] %vm1328, %v1264
        %1330 = vst.msk [vmem:[%s215 + $0x8] sm:$0xff] %vm1328, %v1265
        %1331 = vst.msk [vmem:[%s215 + $0x10] sm:$0xff] %vm1328, %v1266
        %1332 = vst.msk [vmem:[%s215 + $0x18] sm:$0xff] %vm1328, %v1267
        %1333 = vst.msk [vmem:[%s215 + $0x20] sm:$0xff] %vm1328, %v1268
        %1334 = vst.msk [vmem:[%s215 + $0x28] sm:$0xff] %vm1328, %v1269
        %1335 = vst.msk [vmem:[%s215 + $0x30] sm:$0xff] %vm1328, %v1270
        %1336 = vst.msk [vmem:[%s215 + $0x38] sm:$0xff] %vm1328, %v1271
        %1337 = vst.msk [vmem:[%s215 + $0x40] sm:$0xff] %vm1328, %v1272
        %1338 = vst.msk [vmem:[%s215 + $0x48] sm:$0xff] %vm1328, %v1273
        %1339 = vst.msk [vmem:[%s215 + $0x50] sm:$0xff] %vm1328, %v1274
        %1340 = vst.msk [vmem:[%s215 + $0x58] sm:$0xff] %vm1328, %v1275
        %1341 = vst.msk [vmem:[%s215 + $0x60] sm:$0xff] %vm1328, %v1276
        %1342 = vst.msk [vmem:[%s215 + $0x68] sm:$0xff] %vm1328, %v1277
        %1343 = vst.msk [vmem:[%s215 + $0x70] sm:$0xff] %vm1328, %v1278
        %1344 = vst.msk [vmem:[%s215 + $0x78] sm:$0xff] %vm1328, %v1279
        %1345 = vst.msk [vmem:[%s215 + $0x80] sm:$0xff] %vm1328, %v1280
        %1346 = vst.msk [vmem:[%s215 + $0x88] sm:$0xff] %vm1328, %v1281
        %1347 = vst.msk [vmem:[%s215 + $0x90] sm:$0xff] %vm1328, %v1282
        %1348 = vst.msk [vmem:[%s215 + $0x98] sm:$0xff] %vm1328, %v1283
        %1349 = vst.msk [vmem:[%s215 + $0xa0] sm:$0xff] %vm1328, %v1284
        %1350 = vst.msk [vmem:[%s215 + $0xa8] sm:$0xff] %vm1328, %v1285
        %1351 = vst.msk [vmem:[%s215 + $0xb0] sm:$0xff] %vm1328, %v1286
        %1352 = vst.msk [vmem:[%s215 + $0xb8] sm:$0xff] %vm1328, %v1287
        %1353 = vst.msk [vmem:[%s215 + $0xc0] sm:$0xff] %vm1328, %v1288
        %1354 = vst.msk [vmem:[%s215 + $0xc8] sm:$0xff] %vm1328, %v1289
        %1355 = vst.msk [vmem:[%s215 + $0xd0] sm:$0xff] %vm1328, %v1290
        %1356 = vst.msk [vmem:[%s215 + $0xd8] sm:$0xff] %vm1328, %v1291
        %1357 = vst.msk [vmem:[%s215 + $0xe0] sm:$0xff] %vm1328, %v1292
        %1358 = vst.msk [vmem:[%s215 + $0xe8] sm:$0xff] %vm1328, %v1293
        %1359 = vst.msk [vmem:[%s215 + $0xf0] sm:$0xff] %vm1328, %v1294
        %1360 = vst.msk [vmem:[%s215 + $0xf8] sm:$0xff] %vm1328, %v1295
        %1361 = vst.msk [vmem:[%s215 + $0x100] sm:$0xff] %vm1328, %v1296
        %1362 = vst.msk [vmem:[%s215 + $0x108] sm:$0xff] %vm1328, %v1297
        %1363 = vst.msk [vmem:[%s215 + $0x110] sm:$0xff] %vm1328, %v1298
        %1364 = vst.msk [vmem:[%s215 + $0x118] sm:$0xff] %vm1328, %v1299
        %1365 = vst.msk [vmem:[%s215 + $0x120] sm:$0xff] %vm1328, %v1300
        %1366 = vst.msk [vmem:[%s215 + $0x128] sm:$0xff] %vm1328, %v1301
        %1367 = vst.msk [vmem:[%s215 + $0x130] sm:$0xff] %vm1328, %v1302
        %1368 = vst.msk [vmem:[%s215 + $0x138] sm:$0xff] %vm1328, %v1303
        %1369 = vst.msk [vmem:[%s215 + $0x140] sm:$0xff] %vm1328, %v1304
        %1370 = vst.msk [vmem:[%s215 + $0x148] sm:$0xff] %vm1328, %v1305
        %1371 = vst.msk [vmem:[%s215 + $0x150] sm:$0xff] %vm1328, %v1306
        %1372 = vst.msk [vmem:[%s215 + $0x158] sm:$0xff] %vm1328, %v1307
        %1373 = vst.msk [vmem:[%s215 + $0x160] sm:$0xff] %vm1328, %v1308
        %1374 = vst.msk [vmem:[%s215 + $0x168] sm:$0xff] %vm1328, %v1309
        %1375 = vst.msk [vmem:[%s215 + $0x170] sm:$0xff] %vm1328, %v1310
        %1376 = vst.msk [vmem:[%s215 + $0x178] sm:$0xff] %vm1328, %v1311
        %1377 = vst.msk [vmem:[%s215 + $0x180] sm:$0xff] %vm1328, %v1312
        %1378 = vst.msk [vmem:[%s215 + $0x188] sm:$0xff] %vm1328, %v1313
        %1379 = vst.msk [vmem:[%s215 + $0x190] sm:$0xff] %vm1328, %v1314
        %1380 = vst.msk [vmem:[%s215 + $0x198] sm:$0xff] %vm1328, %v1315
        %1381 = vst.msk [vmem:[%s215 + $0x1a0] sm:$0xff] %vm1328, %v1316
        %1382 = vst.msk [vmem:[%s215 + $0x1a8] sm:$0xff] %vm1328, %v1317
        %1383 = vst.msk [vmem:[%s215 + $0x1b0] sm:$0xff] %vm1328, %v1318
        %1384 = vst.msk [vmem:[%s215 + $0x1b8] sm:$0xff] %vm1328, %v1319
        %1385 = vst.msk [vmem:[%s215 + $0x1c0] sm:$0xff] %vm1328, %v1320
        %1386 = vst.msk [vmem:[%s215 + $0x1c8] sm:$0xff] %vm1328, %v1321
        %1387 = vst.msk [vmem:[%s215 + $0x1d0] sm:$0xff] %vm1328, %v1322
        %1388 = vst.msk [vmem:[%s215 + $0x1d8] sm:$0xff] %vm1328, %v1323
        %1389 = vst.msk [vmem:[%s215 + $0x1e0] sm:$0xff] %vm1328, %v1324
        %1390 = vst.msk [vmem:[%s215 + $0x1e8] sm:$0xff] %vm1328, %v1325
        %1391 = vst.msk [vmem:[%s215 + $0x1f0] sm:$0xff] %vm1328, %v1326
        %1392 = vst.msk [vmem:[%s215 + $0x1f8] sm:$0xff] %vm1328, %v1327
      $region52: #{tpu_custom_call.1} parent=35 // pred_fallthru
        _
      %s1393 = smul.u32 %s20, %s19
      %s1394 = smul.u32 64, %s1393
      %p1395 = scmp.lt.s32.totalorder %s1394, 63
      %s1396 = scalar_select %p1395, %s1394, 63
      %s1397 = smul.addr %s1396, 8
      %s1398 = scalar_lea.vmem %s4, %s1397
      // Predicated region
      $region53: #{tpu_custom_call.1} parent=35 // pred_check
        %p1399 = pneg %p136
      $region54: #{tpu_custom_call.1} parent=35 // pred_check_branch
        %1401 = sbr.rel (%p1399) target = $region56
      $region55: #{tpu_custom_call.1} parent=35 // pred_region
        %s1402 = smul.u32 %s20, %s19
        %s1403 = smul.u32 64, %s1402
      $region56: #{tpu_custom_call.1} parent=35 // pred_fallthru
        _
    $region36: #{tpu_custom_call.1} parent=5 // pred_fallthru
      _
    %p1404 = scmp.le.s32.totalorder 2, %s10
    // Predicated region
    $region57: #{tpu_custom_call.1} parent=5 // pred_check
      %p1405 = pneg %p1404
    $region58: #{tpu_custom_call.1} parent=5 // pred_check_branch
      %1407 = sbr.rel (%p1405) target = $region60
    $region59: #{tpu_custom_call.1} parent=5 // pred_region
      %s1408 = ssub.s32 %s10, 2
      // Predicated region
      $region61: #{tpu_custom_call.1} parent=59 // pred_check
        %p1409 = pneg %p142
      $region62: #{tpu_custom_call.1} parent=59 // pred_check_branch
        %1411 = sbr.rel (%p1409) target = $region64
      $region63: #{tpu_custom_call.1} parent=59 // pred_region
        %s1412 = smul.u32 %s22, %s21
        %s1413 = smul.u32 64, %s1412
        %p1414 = scmp.lt.s32.totalorder %s1413, 63
        %s1415 = scalar_select %p1414, %s1413, 63
        %s1416 = smul.addr %s1415, 8
        %s1417 = scalar_lea.vmem %s4, %s1416
      $region64: #{tpu_custom_call.1} parent=59 // pred_fallthru
        _
    $region60: #{tpu_custom_call.1} parent=5 // pred_fallthru
      _
  $region6: #{tpu_custom_call.1} parent=0 // loop_footer
    %s14 = sadd.s32 1, %s10
  $region7: #{tpu_custom_call.1} parent=0 // loop_footer_branch
    %9 = sbr.rel target = $region3
  $region8: #{tpu_custom_call.1} parent=0 // loop_exit
    _

</llo_original>
